<compile_context>
chip_gen: v7x
topology: tpu7x:2x2x1
jax: 0.10.0
libtpu: 0.0.40
codegen_flags: <defaults>
</compile_context>

<pallas_src>
import functools

import jax
import jax.numpy as jnp
import numpy as np
from jax.experimental import pallas as pl
from jax.experimental.pallas import tpu as pltpu


# =========================== Pallas kernel ===========================

def _fused_attention_kernel(x_ref, wqkv_ref, wo_ref, b_ref, o_ref, *,
                            heads, dim_head, scale):
    n = x_ref.shape[1]
    d_model = x_ref.shape[2]

    # Activations for the MXU in bf16; accumulation is always f32.
    x = x_ref[0].astype(jnp.bfloat16)                               # (n, D)
    xh = jnp.broadcast_to(x[None], (heads, n, d_model))             # (H, n, D)

    # Fused QKV projection, all heads in one batched matmul:
    #   (H, n, D) @ (H, D, 3*dh) -> (H, n, 3*dh)
    qkv = jnp.einsum("hnd,hde->hne", xh, wqkv_ref[...],
                     preferred_element_type=jnp.float32)
    q = qkv[:, :, :dim_head].astype(jnp.bfloat16)
    k = qkv[:, :, dim_head:2 * dim_head].astype(jnp.bfloat16)
    v = qkv[:, :, 2 * dim_head:].astype(jnp.bfloat16)

    # Scores + numerically-stable softmax (f32 on the VPU/EUP path).
    s = jnp.einsum("hqe,hke->hqk", q, k,
                   preferred_element_type=jnp.float32) * scale      # (H, n, n)
    s = s - jnp.max(s, axis=-1, keepdims=True)
    p = jnp.exp(s)
    p = p * pl.reciprocal(jnp.sum(p, axis=-1, keepdims=True), approx=True)

    # Attention-weighted values, all heads at once.
    o = jnp.einsum("hqk,hke->hqe", p.astype(jnp.bfloat16), v,
                   preferred_element_type=jnp.float32)              # (H, n, dh)

    # Output projection: sum_h o[h] @ Wo[h] + b.  Head-major Wo avoids any
    # in-kernel 'h n e -> n (h e)' transpose; the head reduction is a cheap
    # VPU add across the leading axis.
    out_h = jnp.einsum("hne,hed->hnd", o.astype(jnp.bfloat16), wo_ref[...],
                       preferred_element_type=jnp.float32)          # (H, n, D)
    o_ref[0] = jnp.sum(out_h, axis=0) + b_ref[...]


# =========================== wrapper ===========================

@functools.partial(jax.jit, static_argnames=("heads", "dim_head"))
def attention_forward(x, w_qkv, w_out, b_out, *, heads, dim_head):
    """x: (B, n, dim); w_qkv: (dim, 3*heads*dim_head)  (to_qkv, bias=False);
    w_out: (heads*dim_head, dim); b_out: (dim,)  (to_out Linear).
    Returns (B, n, dim) float32 — matches PyTorch Attention.forward."""
    B, n, d_model = x.shape
    inner = heads * dim_head
    assert w_qkv.shape == (d_model, 3 * inner)
    assert w_out.shape == (inner, d_model)
    # TODO(synk): the project_out=False path (heads==1 and dim_head==dim ->
    # to_out = nn.Identity()) is not special-cased; default module params
    # (heads=8, dim_head=64) always take the Linear+Dropout(0) path.

    # Head-major weight layout (built once, outside the kernel):
    #   wqkv_h[h, :, 0:dh] = Wq_h, [dh:2dh] = Wk_h, [2dh:3dh] = Wv_h
    wqkv_h = (w_qkv.reshape(d_model, 3, heads, dim_head)
              .transpose(2, 0, 1, 3)
              .reshape(heads, d_model, 3 * dim_head)
              .astype(jnp.bfloat16))
    wo_h = w_out.reshape(heads, dim_head, d_model).astype(jnp.bfloat16)
    b2 = b_out.reshape(1, d_model).astype(jnp.float32)
    x = x.astype(jnp.float32)

    kernel = functools.partial(_fused_attention_kernel, heads=heads,
                               dim_head=dim_head, scale=dim_head ** -0.5)
    return pl.pallas_call(
        kernel,
        grid=(B,),
        in_specs=[
            pl.BlockSpec((1, n, d_model), lambda b: (b, 0, 0)),
            pl.BlockSpec((heads, d_model, 3 * dim_head), lambda b: (0, 0, 0)),
            pl.BlockSpec((heads, dim_head, d_model), lambda b: (0, 0, 0)),
            pl.BlockSpec((1, d_model), lambda b: (0, 0)),
        ],
        out_specs=pl.BlockSpec((1, n, d_model), lambda b: (b, 0, 0)),
        out_shape=jax.ShapeDtypeStruct((B, n, d_model), jnp.float32),
        compiler_params=pltpu.CompilerParams(dimension_semantics=("parallel",)),
    )(x, wqkv_h, wo_h, b2)


# ================== pure-JAX reference (module semantics) ==================

def attention_ref(x, w_qkv, w_out, b_out, *, heads, dim_head):
    B, n, _ = x.shape
    inner = heads * dim_head
    qkv = jnp.einsum("bnd,de->bne", x, w_qkv)
    q, k, v = jnp.split(qkv, 3, axis=-1)

    def split_heads(t):  # 'b n (h d) -> b h n d'
        return t.reshape(B, n, heads, dim_head).transpose(0, 2, 1, 3)

    q, k, v = split_heads(q), split_heads(k), split_heads(v)
    dots = jnp.einsum("bhid,bhjd->bhij", q, k) * (dim_head ** -0.5)
    attn = jax.nn.softmax(dots, axis=-1)
    out = jnp.einsum("bhij,bhjd->bhid", attn, v)
    out = out.transpose(0, 2, 1, 3).reshape(B, n, inner)   # 'b h n d -> b n (h d)'
    return out @ w_out + b_out                              # to_out (Dropout(0)=identity)


# =========================== demo ===========================

if __name__ == "__main__":
    B, N, DIM = 2, 8, 128          # dim=128 keeps every store lane-dense
    HEADS, DIM_HEAD = 8, 64        # module defaults
    INNER = HEADS * DIM_HEAD

    key = jax.random.PRNGKey(0)
    kx, kq, ko, kb = jax.random.split(key, 4)
    x = jax.random.normal(kx, (B, N, DIM), jnp.float32)
    w_qkv = jax.random.normal(kq, (DIM, 3 * INNER), jnp.float32) * (DIM ** -0.5)
    w_out = jax.random.normal(ko, (INNER, DIM), jnp.float32) * (INNER ** -0.5)
    b_out = jax.random.normal(kb, (DIM,), jnp.float32) * 0.02
    # nn.Dropout(p=0.0) inside to_out is an identity (eval semantics) and is omitted.

    out = attention_forward(x, w_qkv, w_out, b_out, heads=HEADS, dim_head=DIM_HEAD)
    out = jax.block_until_ready(out)

    ref = attention_ref(x, w_qkv, w_out, b_out, heads=HEADS, dim_head=DIM_HEAD)
    # Loose tolerance: kernel uses bf16 MXU operands with f32 accumulation
    # and an approximate (EUP) reciprocal in the softmax denominator.
    np.testing.assert_allclose(np.asarray(out), np.asarray(ref), rtol=1e-1, atol=1e-1)
    assert out.shape == (B, N, DIM)
    print("KERNEL_OK")
</pallas_src>

<mosaic_0001>
module attributes {stable_mosaic.version = 11 : i64} {
  func.func @_fused_attention_kernel(%arg0: i32, %arg1: memref<1x8x128xf32, #tpu.memory_space<vmem>>, %arg2: memref<8x128x192xbf16, #tpu.memory_space<vmem>>, %arg3: memref<8x64x128xbf16, #tpu.memory_space<vmem>>, %arg4: memref<1x128xf32, #tpu.memory_space<vmem>>, %arg5: memref<1x8x128xf32, #tpu.memory_space<vmem>>) attributes {dimension_semantics = [#tpu.dimension_semantics<parallel>], iteration_bounds = array<i64: 2>, scalar_prefetch = 0 : i64, scratch_operands = 0 : i64, tpu.core_type = #tpu.core_type<tc>, window_params = [{transform_indices = @transform_0, window_bounds = array<i64: 1, 8, 128>}, {pipeline_mode = #tpu.pipeline_mode<synchronous>, transform_indices = @transform_1, window_bounds = array<i64: 8, 128, 192>}, {pipeline_mode = #tpu.pipeline_mode<synchronous>, transform_indices = @transform_2, window_bounds = array<i64: 8, 64, 128>}, {pipeline_mode = #tpu.pipeline_mode<synchronous>, transform_indices = @transform_3, window_bounds = array<i64: 1, 128>}, {transform_indices = @transform_4, window_bounds = array<i64: 1, 8, 128>}]} {
    %c0 = arith.constant 0 : index
    %c0_0 = arith.constant 0 : index
    %c0_1 = arith.constant 0 : index
    %0 = vector.load %arg1[%c0, %c0_0, %c0_1] : memref<1x8x128xf32, #tpu.memory_space<vmem>>, vector<1x8x128xf32>
    %1 = vector.shape_cast %0 : vector<1x8x128xf32> to vector<8x128xf32>
    %2 = arith.truncf %1 : vector<8x128xf32> to vector<8x128xbf16>
    %3 = vector.shape_cast %2 : vector<8x128xbf16> to vector<1x8x128xbf16>
    %4 = vector.shape_cast %3 : vector<1x8x128xbf16> to vector<1x8x128xbf16>
    %5 = vector.broadcast %4 : vector<1x8x128xbf16> to vector<8x8x128xbf16>
    %c0_2 = arith.constant 0 : index
    %c0_3 = arith.constant 0 : index
    %c0_4 = arith.constant 0 : index
    %6 = vector.load %arg2[%c0_2, %c0_3, %c0_4] : memref<8x128x192xbf16, #tpu.memory_space<vmem>>, vector<8x128x192xbf16>
    "tpu.trace_start"() <{level = 10 : i32, message = "hnd,hde->hne"}> : () -> ()
    %cst = arith.constant dense<0.000000e+00> : vector<8x8x192xf32>
    %7 = tpu.matmul %5, %6, %cst {dimension_numbers = #tpu.dot_dimension_numbers<[2], [1], [1], [2], [0, 0, 0, 1, 1, 2], [0], [0]>} : vector<8x8x128xbf16>, vector<8x128x192xbf16>, vector<8x8x192xf32> -> vector<8x8x192xf32>
    "tpu.trace_stop"() : () -> ()
    %8 = vector.extract_strided_slice %7 {offsets = [0, 0, 0], sizes = [8, 8, 64], strides = [1, 1, 1]} : vector<8x8x192xf32> to vector<8x8x64xf32>
    %9 = arith.truncf %8 : vector<8x8x64xf32> to vector<8x8x64xbf16>
    %10 = vector.extract_strided_slice %7 {offsets = [0, 0, 64], sizes = [8, 8, 64], strides = [1, 1, 1]} : vector<8x8x192xf32> to vector<8x8x64xf32>
    %11 = arith.truncf %10 : vector<8x8x64xf32> to vector<8x8x64xbf16>
    %12 = vector.extract_strided_slice %7 {offsets = [0, 0, 128], sizes = [8, 8, 64], strides = [1, 1, 1]} : vector<8x8x192xf32> to vector<8x8x64xf32>
    %13 = arith.truncf %12 : vector<8x8x64xf32> to vector<8x8x64xbf16>
    "tpu.trace_start"() <{level = 10 : i32, message = "hqe,hke->hqk"}> : () -> ()
    %cst_5 = arith.constant dense<0.000000e+00> : vector<8x8x8xf32>
    %14 = tpu.matmul %9, %11, %cst_5 {dimension_numbers = #tpu.dot_dimension_numbers<[2], [2], [1], [1], [0, 0, 0, 1, 1, 1], [0], [0]>} : vector<8x8x64xbf16>, vector<8x8x64xbf16>, vector<8x8x8xf32> -> vector<8x8x8xf32>
    "tpu.trace_stop"() : () -> ()
    %cst_6 = arith.constant 1.250000e-01 : f32
    %15 = vector.broadcast %cst_6 : f32 to vector<8x8x8xf32>
    %16 = arith.mulf %14, %15 : vector<8x8x8xf32>
    %cst_7 = arith.constant dense<0xFF800000> : vector<8x8xf32>
    %17 = vector.multi_reduction <maximumf>, %16, %cst_7 [2] : vector<8x8x8xf32> to vector<8x8xf32>
    %18 = vector.shape_cast %17 : vector<8x8xf32> to vector<8x8x1xf32>
    %19 = vector.broadcast %18 : vector<8x8x1xf32> to vector<8x8x8xf32>
    %20 = arith.subf %16, %19 : vector<8x8x8xf32>
    %21 = math.exp %20 : vector<8x8x8xf32>
    %cst_8 = arith.constant dense<0.000000e+00> : vector<8x8xf32>
    %22 = vector.multi_reduction <add>, %21, %cst_8 [2] : vector<8x8x8xf32> to vector<8x8xf32>
    %23 = vector.shape_cast %22 : vector<8x8xf32> to vector<8x8x1xf32>
    %24 = tpu.reciprocal %23 {approx = true} : vector<8x8x1xf32> -> vector<8x8x1xf32>
    %25 = vector.broadcast %24 : vector<8x8x1xf32> to vector<8x8x8xf32>
    %26 = arith.mulf %21, %25 : vector<8x8x8xf32>
    %27 = arith.truncf %26 : vector<8x8x8xf32> to vector<8x8x8xbf16>
    "tpu.trace_start"() <{level = 10 : i32, message = "hqk,hke->hqe"}> : () -> ()
    %cst_9 = arith.constant dense<0.000000e+00> : vector<8x8x64xf32>
    %28 = tpu.matmul %27, %13, %cst_9 {dimension_numbers = #tpu.dot_dimension_numbers<[2], [1], [1], [2], [0, 0, 0, 1, 1, 2], [0], [0]>} : vector<8x8x8xbf16>, vector<8x8x64xbf16>, vector<8x8x64xf32> -> vector<8x8x64xf32>
    "tpu.trace_stop"() : () -> ()
    %29 = arith.truncf %28 : vector<8x8x64xf32> to vector<8x8x64xbf16>
    %c0_10 = arith.constant 0 : index
    %c0_11 = arith.constant 0 : index
    %c0_12 = arith.constant 0 : index
    %30 = vector.load %arg3[%c0_10, %c0_11, %c0_12] : memref<8x64x128xbf16, #tpu.memory_space<vmem>>, vector<8x64x128xbf16>
    "tpu.trace_start"() <{level = 10 : i32, message = "hne,hed->hnd"}> : () -> ()
    %cst_13 = arith.constant dense<0.000000e+00> : vector<8x8x128xf32>
    %31 = tpu.matmul %29, %30, %cst_13 {dimension_numbers = #tpu.dot_dimension_numbers<[2], [1], [1], [2], [0, 0, 0, 1, 1, 2], [0], [0]>} : vector<8x8x64xbf16>, vector<8x64x128xbf16>, vector<8x8x128xf32> -> vector<8x8x128xf32>
    "tpu.trace_stop"() : () -> ()
    %cst_14 = arith.constant dense<0.000000e+00> : vector<8x128xf32>
    %32 = vector.multi_reduction <add>, %31, %cst_14 [0] : vector<8x8x128xf32> to vector<8x128xf32>
    %c0_15 = arith.constant 0 : index
    %c0_16 = arith.constant 0 : index
    %33 = vector.load %arg4[%c0_15, %c0_16] : memref<1x128xf32, #tpu.memory_space<vmem>>, vector<1x128xf32>
    %34 = vector.broadcast %33 : vector<1x128xf32> to vector<8x128xf32>
    %35 = arith.addf %32, %34 : vector<8x128xf32>
    %c0_17 = arith.constant 0 : index
    %c0_18 = arith.constant 0 : index
    %c0_19 = arith.constant 0 : index
    %36 = vector.load %arg5[%c0_17, %c0_18, %c0_19] : memref<1x8x128xf32, #tpu.memory_space<vmem>>, vector<1x8x128xf32>
    %37 = vector.shape_cast %36 : vector<1x8x128xf32> to vector<8x128xf32>
    %38 = vector.shape_cast %35 : vector<8x128xf32> to vector<1x8x128xf32>
    tpu.vector_store %arg5[%c0_17, %c0_18, %c0_19], %38 {strides = array<i32>} : memref<1x8x128xf32, #tpu.memory_space<vmem>>, vector<1x8x128xf32>,
    return
  }
  func.func @transform_0(%arg0: i32) -> (i32, i32, i32) {
    %c0_i32 = arith.constant 0 : i32
    %c0_i32_0 = arith.constant 0 : i32
    %c0_i32_1 = arith.constant 0 : i32
    return %arg0, %c0_i32, %c0_i32_0 : i32, i32, i32
  }
  func.func @transform_1(%arg0: i32) -> (i32, i32, i32) {
    %c0_i32 = arith.constant 0 : i32
    %c0_i32_0 = arith.constant 0 : i32
    %c0_i32_1 = arith.constant 0 : i32
    %c0_i32_2 = arith.constant 0 : i32
    return %c0_i32, %c0_i32_0, %c0_i32_1 : i32, i32, i32
  }
  func.func @transform_2(%arg0: i32) -> (i32, i32, i32) {
    %c0_i32 = arith.constant 0 : i32
    %c0_i32_0 = arith.constant 0 : i32
    %c0_i32_1 = arith.constant 0 : i32
    %c0_i32_2 = arith.constant 0 : i32
    return %c0_i32, %c0_i32_0, %c0_i32_1 : i32, i32, i32
  }
  func.func @transform_3(%arg0: i32) -> (i32, i32) {
    %c0_i32 = arith.constant 0 : i32
    %c0_i32_0 = arith.constant 0 : i32
    %c0_i32_1 = arith.constant 0 : i32
    return %c0_i32, %c0_i32_0 : i32, i32
  }
  func.func @transform_4(%arg0: i32) -> (i32, i32, i32) {
    %c0_i32 = arith.constant 0 : i32
    %c0_i32_0 = arith.constant 0 : i32
    %c0_i32_1 = arith.constant 0 : i32
    return %arg0, %c0_i32, %c0_i32_0 : i32, i32, i32
  }
}

</mosaic_0001>

<llo_original>
// kernel: attention_forward.1
$region0: #{attention_forward.1}
  #allocation0 [shape = 'u32[]', space=smem, size = 0x4, offset = 0x4, fixed_abs, tag = 'smem constant byte address 0x4 - core index']
  #allocation1 [shape = 'u32[144,128]{1,0:T(1,128)}', space=vmem, size = 0x12000, scoped, tag = 'internal scratch']
  %s0 = inlined_call_operand.vmem [shape: f32[2,8,128], index: 0, kind: input, shape index: {}]
  %s1 = inlined_call_operand.vmem [shape: bf16[8,128,192], index: 1, kind: input, shape index: {}]
  %s2 = inlined_call_operand.vmem [shape: bf16[8,64,128], index: 2, kind: input, shape index: {}]
  %s3 = inlined_call_operand.vmem [shape: f32[1,128], index: 3, kind: input, shape index: {}]
  %s4 = inlined_call_operand.hbm [shape: f32[2,8,128], index: 4, kind: output, shape index: {}]
  %s5 = sld [smem:[#allocation0]]
  $region49: #{attention_forward.1} parent=0
    _
  %s7 = ssub.s32 1, %s5
  %s8 = scalar_select 0, %s7, %s5
  $region1: #{attention_forward.1} parent=0
    #allocation2 [shape = 'u8[8192]{0}', space=vmem, size = 0x2000, scoped, tag = 'output window, operand 0']
    #allocation3 [shape = 's32[2]{0}', space=sflag, size = 0x8, scoped, tag = 'scoped memory for attention_forward.1']
    %9 = vsyncpa [#allocation3], 0
    %s10 = scalar_lea.sflag [#allocation3], 1
    %11 = vsyncpa %s10, 0
    loop: start=0, step=1, limit=4
    $region2: #{attention_forward.1} parent=1 // loop_pre_header
      _
    $region3: #{attention_forward.1} parent=1 // loop_header
      %s13 = sphi 0, %s17
      %p14 = scmp.ge.s32.totalorder %s13, 4
      %s23 = sphi 0, %s25
      %s26 = sphi 0, %s23
      %s27 = sphi 0, %s26
      %s43 = sphi 0, %s27
      %s47 = sphi 0, %s47
      %s49 = sphi 0, %s47
      %s50 = sphi 0, %s49
      %s64 = sphi 0, %s50
      %s68 = sphi 0, %s68
      %s70 = sphi 0, %s68
      %s71 = sphi 0, %s70
      %s85 = sphi 0, %s71
      %s89 = sphi 0, %s89
      %s91 = sphi 0, %s89
      %s92 = sphi 0, %s91
      %s106 = sphi 0, %s92
      %s112 = sphi 0, %s114
      %s115 = sphi 0, %s112
      %s116 = sphi 0, %s115
      %s132 = sphi 0, %s116
    $region4: #{attention_forward.1} parent=1 // loop_header_branch
      %16 = sbr.rel (%p14) target = $region8
    $region5: #{attention_forward.1} parent=1 // loop_body
      %s18 = ssub.s32 %s13, 1
      %s19 = ssub.s32 %s13, 2
      %s20 = sadd.s32 %s13, 1
      %s21 = ssub.s32 %s13, %s20
      %p22 = scmp.eq.s32.totalorder %s21, 0
      %s24 = sadd.s32 %s23, 1
      %s25 = scalar_select %p22, %s23, %s24
      %p28 = pneg %p22
      %p29 = scmp.eq.s32.totalorder %s13, 1
      %p30 = por %p28, %p29
      %p31 = scmp.ne.s32.totalorder %s23, %s26
      %p32 = scmp.eq.s32.totalorder %s13, 0
      %p33 = por %p31, %p32
      %p34 = scmp.ne.s32.totalorder %s23, %s26
      %p35 = scmp.eq.s32.totalorder %s18, 1
      %p36 = por %p34, %p35
      %p37 = scmp.ne.s32.totalorder %s26, %s27
      %p38 = scmp.eq.s32.totalorder %s18, 0
      %p39 = por %p37, %p38
      %p40 = scmp.ne.s32.totalorder %s26, %s27
      %p41 = scmp.eq.s32.totalorder %s19, 1
      %p42 = por %p40, %p41
      %p44 = scmp.ne.s32.totalorder %s27, %s43
      %p45 = scmp.eq.s32.totalorder %s19, 0
      %p46 = por %p44, %p45
      %s48 = sadd.s32 %s47, 1
      %p51 = scmp.eq.s32.totalorder %s13, 1
      %p52 = scmp.ne.s32.totalorder %s47, %s49
      %p53 = scmp.eq.s32.totalorder %s13, 0
      %p54 = por %p52, %p53
      %p55 = scmp.ne.s32.totalorder %s47, %s49
      %p56 = scmp.eq.s32.totalorder %s18, 1
      %p57 = por %p55, %p56
      %p58 = scmp.ne.s32.totalorder %s49, %s50
      %p59 = scmp.eq.s32.totalorder %s18, 0
      %p60 = por %p58, %p59
      %p61 = scmp.ne.s32.totalorder %s49, %s50
      %p62 = scmp.eq.s32.totalorder %s19, 1
      %p63 = por %p61, %p62
      %p65 = scmp.ne.s32.totalorder %s50, %s64
      %p66 = scmp.eq.s32.totalorder %s19, 0
      %p67 = por %p65, %p66
      %s69 = sadd.s32 %s68, 1
      %p72 = scmp.eq.s32.totalorder %s13, 1
      %p73 = scmp.ne.s32.totalorder %s68, %s70
      %p74 = scmp.eq.s32.totalorder %s13, 0
      %p75 = por %p73, %p74
      %p76 = scmp.ne.s32.totalorder %s68, %s70
      %p77 = scmp.eq.s32.totalorder %s18, 1
      %p78 = por %p76, %p77
      %p79 = scmp.ne.s32.totalorder %s70, %s71
      %p80 = scmp.eq.s32.totalorder %s18, 0
      %p81 = por %p79, %p80
      %p82 = scmp.ne.s32.totalorder %s70, %s71
      %p83 = scmp.eq.s32.totalorder %s19, 1
      %p84 = por %p82, %p83
      %p86 = scmp.ne.s32.totalorder %s71, %s85
      %p87 = scmp.eq.s32.totalorder %s19, 0
      %p88 = por %p86, %p87
      %s90 = sadd.s32 %s89, 1
      %p93 = scmp.eq.s32.totalorder %s13, 1
      %p94 = scmp.ne.s32.totalorder %s89, %s91
      %p95 = scmp.eq.s32.totalorder %s13, 0
      %p96 = por %p94, %p95
      %p97 = scmp.ne.s32.totalorder %s89, %s91
      %p98 = scmp.eq.s32.totalorder %s18, 1
      %p99 = por %p97, %p98
      %p100 = scmp.ne.s32.totalorder %s91, %s92
      %p101 = scmp.eq.s32.totalorder %s18, 0
      %p102 = por %p100, %p101
      %p103 = scmp.ne.s32.totalorder %s91, %s92
      %p104 = scmp.eq.s32.totalorder %s19, 1
      %p105 = por %p103, %p104
      %p107 = scmp.ne.s32.totalorder %s92, %s106
      %p108 = scmp.eq.s32.totalorder %s19, 0
      %p109 = por %p107, %p108
      %s110 = ssub.s32 %s13, %s20
      %p111 = scmp.eq.s32.totalorder %s110, 0
      %s113 = sadd.s32 %s112, 1
      %s114 = scalar_select %p111, %s112, %s113
      %p117 = pneg %p111
      %p118 = scmp.eq.s32.totalorder %s13, 1
      %p119 = por %p117, %p118
      %p120 = scmp.ne.s32.totalorder %s112, %s115
      %p121 = scmp.eq.s32.totalorder %s13, 0
      %p122 = por %p120, %p121
      %p123 = scmp.ne.s32.totalorder %s112, %s115
      %p124 = scmp.eq.s32.totalorder %s18, 1
      %p125 = por %p123, %p124
      %p126 = scmp.ne.s32.totalorder %s115, %s116
      %p127 = scmp.eq.s32.totalorder %s18, 0
      %p128 = por %p126, %p127
      %p129 = scmp.ne.s32.totalorder %s115, %s116
      %p130 = scmp.eq.s32.totalorder %s19, 1
      %p131 = por %p129, %p130
      %p133 = scmp.ne.s32.totalorder %s116, %s132
      %p134 = scmp.eq.s32.totalorder %s19, 0
      %p135 = por %p133, %p134
      %p136 = scmp.le.s32.totalorder 1, %s13
      %p137 = scmp.lt.s32.totalorder %s13, 3
      %p138 = pnand %p136, %p137
      %p139 = pneg %p138
      // Predicated region
      $region9: #{attention_forward.1} parent=5 // pred_check
        _
      $region10: #{attention_forward.1} parent=5 // pred_check_branch
        %141 = sbr.rel (%p138) target = $region12
      $region11: #{attention_forward.1} parent=5 // pred_region
        %s142 = ssub.s32 %s13, 1
        // Predicated region
        $region13: #{attention_forward.1} parent=11 // pred_check
          %p143 = pneg %p60
        $region14: #{attention_forward.1} parent=11 // pred_check_branch
          %145 = sbr.rel (%p143) target = $region16
        $region15: #{attention_forward.1} parent=11 // pred_region
          _
        $region16: #{attention_forward.1} parent=11 // pred_fallthru
          _
        // Predicated region
        $region17: #{attention_forward.1} parent=11 // pred_check
          %p146 = pneg %p81
        $region18: #{attention_forward.1} parent=11 // pred_check_branch
          %148 = sbr.rel (%p146) target = $region20
        $region19: #{attention_forward.1} parent=11 // pred_region
          _
        $region20: #{attention_forward.1} parent=11 // pred_fallthru
          _
        // Predicated region
        $region21: #{attention_forward.1} parent=11 // pred_check
          %p149 = pneg %p102
        $region22: #{attention_forward.1} parent=11 // pred_check_branch
          %151 = sbr.rel (%p149) target = $region24
        $region23: #{attention_forward.1} parent=11 // pred_region
          _
        $region24: #{attention_forward.1} parent=11 // pred_fallthru
          _
      $region12: #{attention_forward.1} parent=5 // pred_fallthru
        _
      %p152 = scmp.lt.s32.totalorder %s13, 2
      // Predicated region
      $region25: #{attention_forward.1} parent=5 // pred_check
        %p153 = pneg %p152
      $region26: #{attention_forward.1} parent=5 // pred_check_branch
        %155 = sbr.rel (%p153) target = $region28
      $region27: #{attention_forward.1} parent=5 // pred_region
        // Predicated region
        $region29: #{attention_forward.1} parent=27 // pred_check
          %p156 = pneg %p33
        $region30: #{attention_forward.1} parent=27 // pred_check_branch
          %158 = sbr.rel (%p156) target = $region32
        $region31: #{attention_forward.1} parent=27 // pred_region
          %p159 = scmp.lt.s32.totalorder %s13, 1
          %s160 = scalar_select %p159, %s13, 1
          %s161 = smul.addr %s160, 8
          %s162 = scalar_lea.vmem %s0, %s161
        $region32: #{attention_forward.1} parent=27 // pred_fallthru
          _
      $region28: #{attention_forward.1} parent=5 // pred_fallthru
        _
      %p163 = scmp.le.s32.totalorder 1, %s13
      %p164 = scmp.lt.s32.totalorder %s13, 3
      %p165 = pnand %p163, %p164
      %p166 = pneg %p165
      // Predicated region
      $region33: #{attention_forward.1} parent=5 // pred_check
        _
      $region34: #{attention_forward.1} parent=5 // pred_check_branch
        %168 = sbr.rel (%p165) target = $region36
      $region35: #{attention_forward.1} parent=5 // pred_region
        %s169 = ssub.s32 %s13, 1
        %p170 = scmp.lt.s32.totalorder %s18, 1
        %s171 = scalar_select %p170, %s18, 1
        %s172 = smul.addr %s171, 8
        %s173 = scalar_lea.vmem %s0, %s172
        %p174 = pneg %p39
        %p175 = pneg %p36
        %p176 = pneg %p60
        %p177 = pneg %p57
        %p178 = pneg %p81
        %p179 = pneg %p78
        %p180 = pneg %p102
        %p181 = pneg %p99
        %p182 = pneg %p128
        %p183 = pneg %p125
        %s184 = sand.u32 %s115, 1
        %s185 = scalar_lea.sflag [#allocation3], %s184
        %s186 = sand.u32 %s115, 1
        %s187 = smul.addr %s186, 8
        %s188 = scalar_lea.vmem [#allocation2], %s187
        %p189 = scmp.lt.s32.totalorder %s18, 1
        %s190 = scalar_select %p189, %s18, 1
        %s191 = smul.addr %s190, 8
        %s192 = scalar_lea.vmem %s0, %s191
        %v194 = vld [vmem:[%s192] sm:$0xff]
        %v195 = vpack.c.bf16 %v194, %v194
        %v196 = vld [vmem:[%s1] sm:$0xff]
        %v197 = vld [vmem:[%s1 + $0x8] sm:$0xff]
        %v198 = vld [vmem:[%s1 + $0x10] sm:$0xff]
        %v199 = vld [vmem:[%s1 + $0x18] sm:$0xff]
        %v200 = vld [vmem:[%s1 + $0x20] sm:$0xff]
        %v201 = vld [vmem:[%s1 + $0x28] sm:$0xff]
        %v202 = vld [vmem:[%s1 + $0x30] sm:$0xff]
        %v203 = vld [vmem:[%s1 + $0x38] sm:$0xff]
        %v204 = vld [vmem:[%s1 + $0x40] sm:$0xff]
        %v205 = vld [vmem:[%s1 + $0x48] sm:$0xff]
        %v206 = vld [vmem:[%s1 + $0x50] sm:$0xff]
        %v207 = vld [vmem:[%s1 + $0x58] sm:$0xff]
        %v208 = vld [vmem:[%s1 + $0x60] sm:$0xff]
        %v209 = vld [vmem:[%s1 + $0x68] sm:$0xff]
        %v210 = vld [vmem:[%s1 + $0x70] sm:$0xff]
        %v211 = vld [vmem:[%s1 + $0x78] sm:$0xff]
        %v212 = vld [vmem:[%s1 + $0x80] sm:$0xff]
        %v213 = vld [vmem:[%s1 + $0x88] sm:$0xff]
        %v214 = vld [vmem:[%s1 + $0x90] sm:$0xff]
        %v215 = vld [vmem:[%s1 + $0x98] sm:$0xff]
        %v216 = vld [vmem:[%s1 + $0xa0] sm:$0xff]
        %v217 = vld [vmem:[%s1 + $0xa8] sm:$0xff]
        %v218 = vld [vmem:[%s1 + $0xb0] sm:$0xff]
        %v219 = vld [vmem:[%s1 + $0xb8] sm:$0xff]
        %v220 = vld [vmem:[%s1 + $0xc0] sm:$0xff]
        %v221 = vld [vmem:[%s1 + $0xc8] sm:$0xff]
        %v222 = vld [vmem:[%s1 + $0xd0] sm:$0xff]
        %v223 = vld [vmem:[%s1 + $0xd8] sm:$0xff]
        %v224 = vld [vmem:[%s1 + $0xe0] sm:$0xff]
        %v225 = vld [vmem:[%s1 + $0xe8] sm:$0xff]
        %v226 = vld [vmem:[%s1 + $0xf0] sm:$0xff]
        %v227 = vld [vmem:[%s1 + $0xf8] sm:$0xff]
        %v228 = vld [vmem:[%s1 + $0x100] sm:$0xff]
        %v229 = vld [vmem:[%s1 + $0x108] sm:$0xff]
        %v230 = vld [vmem:[%s1 + $0x110] sm:$0xff]
        %v231 = vld [vmem:[%s1 + $0x118] sm:$0xff]
        %v232 = vld [vmem:[%s1 + $0x120] sm:$0xff]
        %v233 = vld [vmem:[%s1 + $0x128] sm:$0xff]
        %v234 = vld [vmem:[%s1 + $0x130] sm:$0xff]
        %v235 = vld [vmem:[%s1 + $0x138] sm:$0xff]
        %v236 = vld [vmem:[%s1 + $0x140] sm:$0xff]
        %v237 = vld [vmem:[%s1 + $0x148] sm:$0xff]
        %v238 = vld [vmem:[%s1 + $0x150] sm:$0xff]
        %v239 = vld [vmem:[%s1 + $0x158] sm:$0xff]
        %v240 = vld [vmem:[%s1 + $0x160] sm:$0xff]
        %v241 = vld [vmem:[%s1 + $0x168] sm:$0xff]
        %v242 = vld [vmem:[%s1 + $0x170] sm:$0xff]
        %v243 = vld [vmem:[%s1 + $0x178] sm:$0xff]
        %v244 = vld [vmem:[%s1 + $0x180] sm:$0xff]
        %v245 = vld [vmem:[%s1 + $0x188] sm:$0xff]
        %v246 = vld [vmem:[%s1 + $0x190] sm:$0xff]
        %v247 = vld [vmem:[%s1 + $0x198] sm:$0xff]
        %v248 = vld [vmem:[%s1 + $0x1a0] sm:$0xff]
        %v249 = vld [vmem:[%s1 + $0x1a8] sm:$0xff]
        %v250 = vld [vmem:[%s1 + $0x1b0] sm:$0xff]
        %v251 = vld [vmem:[%s1 + $0x1b8] sm:$0xff]
        %v252 = vld [vmem:[%s1 + $0x1c0] sm:$0xff]
        %v253 = vld [vmem:[%s1 + $0x1c8] sm:$0xff]
        %v254 = vld [vmem:[%s1 + $0x1d0] sm:$0xff]
        %v255 = vld [vmem:[%s1 + $0x1d8] sm:$0xff]
        %v256 = vld [vmem:[%s1 + $0x1e0] sm:$0xff]
        %v257 = vld [vmem:[%s1 + $0x1e8] sm:$0xff]
        %v258 = vld [vmem:[%s1 + $0x1f0] sm:$0xff]
        %v259 = vld [vmem:[%s1 + $0x1f8] sm:$0xff]
        %v260 = vld [vmem:[%s1 + $0x200] sm:$0xff]
        %v261 = vld [vmem:[%s1 + $0x208] sm:$0xff]
        %v262 = vld [vmem:[%s1 + $0x210] sm:$0xff]
        %v263 = vld [vmem:[%s1 + $0x218] sm:$0xff]
        %v264 = vld [vmem:[%s1 + $0x220] sm:$0xff]
        %v265 = vld [vmem:[%s1 + $0x228] sm:$0xff]
        %v266 = vld [vmem:[%s1 + $0x230] sm:$0xff]
        %v267 = vld [vmem:[%s1 + $0x238] sm:$0xff]
        %v268 = vld [vmem:[%s1 + $0x240] sm:$0xff]
        %v269 = vld [vmem:[%s1 + $0x248] sm:$0xff]
        %v270 = vld [vmem:[%s1 + $0x250] sm:$0xff]
        %v271 = vld [vmem:[%s1 + $0x258] sm:$0xff]
        %v272 = vld [vmem:[%s1 + $0x260] sm:$0xff]
        %v273 = vld [vmem:[%s1 + $0x268] sm:$0xff]
        %v274 = vld [vmem:[%s1 + $0x270] sm:$0xff]
        %v275 = vld [vmem:[%s1 + $0x278] sm:$0xff]
        %v276 = vld [vmem:[%s1 + $0x280] sm:$0xff]
        %v277 = vld [vmem:[%s1 + $0x288] sm:$0xff]
        %v278 = vld [vmem:[%s1 + $0x290] sm:$0xff]
        %v279 = vld [vmem:[%s1 + $0x298] sm:$0xff]
        %v280 = vld [vmem:[%s1 + $0x2a0] sm:$0xff]
        %v281 = vld [vmem:[%s1 + $0x2a8] sm:$0xff]
        %v282 = vld [vmem:[%s1 + $0x2b0] sm:$0xff]
        %v283 = vld [vmem:[%s1 + $0x2b8] sm:$0xff]
        %v284 = vld [vmem:[%s1 + $0x2c0] sm:$0xff]
        %v285 = vld [vmem:[%s1 + $0x2c8] sm:$0xff]
        %v286 = vld [vmem:[%s1 + $0x2d0] sm:$0xff]
        %v287 = vld [vmem:[%s1 + $0x2d8] sm:$0xff]
        %v288 = vld [vmem:[%s1 + $0x2e0] sm:$0xff]
        %v289 = vld [vmem:[%s1 + $0x2e8] sm:$0xff]
        %v290 = vld [vmem:[%s1 + $0x2f0] sm:$0xff]
        %v291 = vld [vmem:[%s1 + $0x2f8] sm:$0xff]
        %v292 = vld [vmem:[%s1 + $0x300] sm:$0xff]
        %v293 = vld [vmem:[%s1 + $0x308] sm:$0xff]
        %v294 = vld [vmem:[%s1 + $0x310] sm:$0xff]
        %v295 = vld [vmem:[%s1 + $0x318] sm:$0xff]
        %v296 = vld [vmem:[%s1 + $0x320] sm:$0xff]
        %v297 = vld [vmem:[%s1 + $0x328] sm:$0xff]
        %v298 = vld [vmem:[%s1 + $0x330] sm:$0xff]
        %v299 = vld [vmem:[%s1 + $0x338] sm:$0xff]
        %v300 = vld [vmem:[%s1 + $0x340] sm:$0xff]
        %v301 = vld [vmem:[%s1 + $0x348] sm:$0xff]
        %v302 = vld [vmem:[%s1 + $0x350] sm:$0xff]
        %v303 = vld [vmem:[%s1 + $0x358] sm:$0xff]
        %v304 = vld [vmem:[%s1 + $0x360] sm:$0xff]
        %v305 = vld [vmem:[%s1 + $0x368] sm:$0xff]
        %v306 = vld [vmem:[%s1 + $0x370] sm:$0xff]
        %v307 = vld [vmem:[%s1 + $0x378] sm:$0xff]
        %v308 = vld [vmem:[%s1 + $0x380] sm:$0xff]
        %v309 = vld [vmem:[%s1 + $0x388] sm:$0xff]
        %v310 = vld [vmem:[%s1 + $0x390] sm:$0xff]
        %v311 = vld [vmem:[%s1 + $0x398] sm:$0xff]
        %v312 = vld [vmem:[%s1 + $0x3a0] sm:$0xff]
        %v313 = vld [vmem:[%s1 + $0x3a8] sm:$0xff]
        %v314 = vld [vmem:[%s1 + $0x3b0] sm:$0xff]
        %v315 = vld [vmem:[%s1 + $0x3b8] sm:$0xff]
        %v316 = vld [vmem:[%s1 + $0x3c0] sm:$0xff]
        %v317 = vld [vmem:[%s1 + $0x3c8] sm:$0xff]
        %v318 = vld [vmem:[%s1 + $0x3d0] sm:$0xff]
        %v319 = vld [vmem:[%s1 + $0x3d8] sm:$0xff]
        %v320 = vld [vmem:[%s1 + $0x3e0] sm:$0xff]
        %v321 = vld [vmem:[%s1 + $0x3e8] sm:$0xff]
        %v322 = vld [vmem:[%s1 + $0x3f0] sm:$0xff]
        %v323 = vld [vmem:[%s1 + $0x3f8] sm:$0xff]
        %v340 = vunpack.c.l.b16 %v196
        %v341 = vunpack.c.h.b16 %v196
        %v342 = vunpack.c.l.b16 %v197
        %v343 = vunpack.c.h.b16 %v197
        %v344 = vunpack.c.l.b16 %v198
        %v345 = vunpack.c.h.b16 %v198
        %v346 = vunpack.c.l.b16 %v199
        %v347 = vunpack.c.h.b16 %v199
        %v348 = vunpack.c.l.b16 %v200
        %v349 = vunpack.c.h.b16 %v200
        %v350 = vunpack.c.l.b16 %v201
        %v351 = vunpack.c.h.b16 %v201
        %v352 = vunpack.c.l.b16 %v202
        %v353 = vunpack.c.h.b16 %v202
        %v354 = vunpack.c.l.b16 %v203
        %v355 = vunpack.c.h.b16 %v203
        %v356 = vunpack.c.l.b16 %v204
        %v357 = vunpack.c.h.b16 %v204
        %v358 = vunpack.c.l.b16 %v205
        %v359 = vunpack.c.h.b16 %v205
        %v360 = vunpack.c.l.b16 %v206
        %v361 = vunpack.c.h.b16 %v206
        %v362 = vunpack.c.l.b16 %v207
        %v363 = vunpack.c.h.b16 %v207
        %v364 = vunpack.c.l.b16 %v208
        %v365 = vunpack.c.h.b16 %v208
        %v366 = vunpack.c.l.b16 %v209
        %v367 = vunpack.c.h.b16 %v209
        %v368 = vunpack.c.l.b16 %v210
        %v369 = vunpack.c.h.b16 %v210
        %v370 = vunpack.c.l.b16 %v211
        %v371 = vunpack.c.h.b16 %v211
        %v372 = vpack.c.b16 %v342, %v340
        %v373 = vpack.c.b16 %v343, %v341
        %v374 = vpack.c.b16 %v346, %v344
        %v375 = vpack.c.b16 %v347, %v345
        %v376 = vpack.c.b16 %v350, %v348
        %v377 = vpack.c.b16 %v351, %v349
        %v378 = vpack.c.b16 %v354, %v352
        %v379 = vpack.c.b16 %v355, %v353
        %v380 = vpack.c.b16 %v358, %v356
        %v381 = vpack.c.b16 %v359, %v357
        %v382 = vpack.c.b16 %v362, %v360
        %v383 = vpack.c.b16 %v363, %v361
        %v384 = vpack.c.b16 %v366, %v364
        %v385 = vpack.c.b16 %v367, %v365
        %v386 = vpack.c.b16 %v370, %v368
        %v387 = vpack.c.b16 %v371, %v369
        %404 = vmatprep.subr.bf16.mxu0 %v373
        %405 = vmatpush1.bf16.msra.mxu0 %v372
        %406 = vmatprep.subr.bf16.mxu0 %v375
        %407 = vmatpush1.bf16.msra.mxu0 %v374
        %408 = vmatprep.subr.bf16.mxu0 %v377
        %409 = vmatpush1.bf16.msra.mxu0 %v376
        %410 = vmatprep.subr.bf16.mxu0 %v379
        %411 = vmatpush1.bf16.msra.mxu0 %v378
        %412 = vmatprep.subr.bf16.mxu0 %v381
        %413 = vmatpush1.bf16.msra.mxu0 %v380
        %414 = vmatprep.subr.bf16.mxu0 %v383
        %415 = vmatpush1.bf16.msra.mxu0 %v382
        %416 = vmatprep.subr.bf16.mxu0 %v385
        %417 = vmatpush1.bf16.msra.mxu0 %v384
        %418 = vmatprep.subr.bf16.mxu0 %v387
        %419 = vmatpush1.bf16.msra.mxu0 %v386
        %420 = vmatprep.subr.bf16.mxu0 0
        %421 = vmatpush1.bf16.msra.mxu0 0
        %422 = vmatprep.subr.bf16.mxu0 0
        %423 = vmatpush1.bf16.msra.mxu0 0
        %424 = vmatprep.subr.bf16.mxu0 0
        %425 = vmatpush1.bf16.msra.mxu0 0
        %426 = vmatprep.subr.bf16.mxu0 0
        %427 = vmatpush1.bf16.msra.mxu0 0
        %428 = vmatprep.subr.bf16.mxu0 0
        %429 = vmatpush1.bf16.msra.mxu0 0
        %430 = vmatprep.subr.bf16.mxu0 0
        %431 = vmatpush1.bf16.msra.mxu0 0
        %432 = vmatprep.subr.bf16.mxu0 0
        %433 = vmatpush1.bf16.msra.mxu0 0
        %434 = vmatprep.subr.bf16.mxu0 0
        %435 = vmatpush1.bf16.msra.mxu0 0
        %436 = vmatprep.mubr.bf16.mxu0 0
        %437 = vmatmul.mubr.bf16.gmra.mrb[0].mxu0 %v195
        %v438 = vpop.f32.mrb[0].mxu0
        %v439 = vadd.f32 0.0, %v438
        %v440 = vpop.f32.mrb[0].mxu0
        %v441 = vadd.f32 0.0, %v440
        %v442 = vpop.f32.mrb[0].mxu0
        %v443 = vpop.f32.mrb[0].mxu0
        %444 = vdwg.mxu0
        %v461 = vunpack.c.l.b16 %v212
        %v462 = vunpack.c.h.b16 %v212
        %v463 = vunpack.c.l.b16 %v213
        %v464 = vunpack.c.h.b16 %v213
        %v465 = vunpack.c.l.b16 %v214
        %v466 = vunpack.c.h.b16 %v214
        %v467 = vunpack.c.l.b16 %v215
        %v468 = vunpack.c.h.b16 %v215
        %v469 = vunpack.c.l.b16 %v216
        %v470 = vunpack.c.h.b16 %v216
        %v471 = vunpack.c.l.b16 %v217
        %v472 = vunpack.c.h.b16 %v217
        %v473 = vunpack.c.l.b16 %v218
        %v474 = vunpack.c.h.b16 %v218
        %v475 = vunpack.c.l.b16 %v219
        %v476 = vunpack.c.h.b16 %v219
        %v477 = vunpack.c.l.b16 %v220
        %v478 = vunpack.c.h.b16 %v220
        %v479 = vunpack.c.l.b16 %v221
        %v480 = vunpack.c.h.b16 %v221
        %v481 = vunpack.c.l.b16 %v222
        %v482 = vunpack.c.h.b16 %v222
        %v483 = vunpack.c.l.b16 %v223
        %v484 = vunpack.c.h.b16 %v223
        %v485 = vunpack.c.l.b16 %v224
        %v486 = vunpack.c.h.b16 %v224
        %v487 = vunpack.c.l.b16 %v225
        %v488 = vunpack.c.h.b16 %v225
        %v489 = vunpack.c.l.b16 %v226
        %v490 = vunpack.c.h.b16 %v226
        %v491 = vunpack.c.l.b16 %v227
        %v492 = vunpack.c.h.b16 %v227
        %v493 = vpack.c.b16 %v463, %v461
        %v494 = vpack.c.b16 %v464, %v462
        %v495 = vpack.c.b16 %v467, %v465
        %v496 = vpack.c.b16 %v468, %v466
        %v497 = vpack.c.b16 %v471, %v469
        %v498 = vpack.c.b16 %v472, %v470
        %v499 = vpack.c.b16 %v475, %v473
        %v500 = vpack.c.b16 %v476, %v474
        %v501 = vpack.c.b16 %v479, %v477
        %v502 = vpack.c.b16 %v480, %v478
        %v503 = vpack.c.b16 %v483, %v481
        %v504 = vpack.c.b16 %v484, %v482
        %v505 = vpack.c.b16 %v487, %v485
        %v506 = vpack.c.b16 %v488, %v486
        %v507 = vpack.c.b16 %v491, %v489
        %v508 = vpack.c.b16 %v492, %v490
        %525 = vmatprep.subr.bf16.mxu0 %v494
        %526 = vmatpush1.bf16.msra.mxu0 %v493
        %527 = vmatprep.subr.bf16.mxu0 %v496
        %528 = vmatpush1.bf16.msra.mxu0 %v495
        %529 = vmatprep.subr.bf16.mxu0 %v498
        %530 = vmatpush1.bf16.msra.mxu0 %v497
        %531 = vmatprep.subr.bf16.mxu0 %v500
        %532 = vmatpush1.bf16.msra.mxu0 %v499
        %533 = vmatprep.subr.bf16.mxu0 %v502
        %534 = vmatpush1.bf16.msra.mxu0 %v501
        %535 = vmatprep.subr.bf16.mxu0 %v504
        %536 = vmatpush1.bf16.msra.mxu0 %v503
        %537 = vmatprep.subr.bf16.mxu0 %v506
        %538 = vmatpush1.bf16.msra.mxu0 %v505
        %539 = vmatprep.subr.bf16.mxu0 %v508
        %540 = vmatpush1.bf16.msra.mxu0 %v507
        %541 = vmatprep.subr.bf16.mxu0 0
        %542 = vmatpush1.bf16.msra.mxu0 0
        %543 = vmatprep.subr.bf16.mxu0 0
        %544 = vmatpush1.bf16.msra.mxu0 0
        %545 = vmatprep.subr.bf16.mxu0 0
        %546 = vmatpush1.bf16.msra.mxu0 0
        %547 = vmatprep.subr.bf16.mxu0 0
        %548 = vmatpush1.bf16.msra.mxu0 0
        %549 = vmatprep.subr.bf16.mxu0 0
        %550 = vmatpush1.bf16.msra.mxu0 0
        %551 = vmatprep.subr.bf16.mxu0 0
        %552 = vmatpush1.bf16.msra.mxu0 0
        %553 = vmatprep.subr.bf16.mxu0 0
        %554 = vmatpush1.bf16.msra.mxu0 0
        %555 = vmatprep.subr.bf16.mxu0 0
        %556 = vmatpush1.bf16.msra.mxu0 0
        %557 = vmatprep.mubr.bf16.mxu0 0
        %558 = vmatmul.mubr.bf16.gmra.mrb[0].mxu0 %v195
        %v559 = vpop.f32.mrb[0].mxu0
        %v560 = vadd.f32 0.0, %v559
        %v561 = vpop.f32.mrb[0].mxu0
        %v562 = vadd.f32 0.0, %v561
        %v563 = vpop.f32.mrb[0].mxu0
        %v564 = vpop.f32.mrb[0].mxu0
        %565 = vdwg.mxu0
        %v582 = vunpack.c.l.b16 %v228
        %v583 = vunpack.c.h.b16 %v228
        %v584 = vunpack.c.l.b16 %v229
        %v585 = vunpack.c.h.b16 %v229
        %v586 = vunpack.c.l.b16 %v230
        %v587 = vunpack.c.h.b16 %v230
        %v588 = vunpack.c.l.b16 %v231
        %v589 = vunpack.c.h.b16 %v231
        %v590 = vunpack.c.l.b16 %v232
        %v591 = vunpack.c.h.b16 %v232
        %v592 = vunpack.c.l.b16 %v233
        %v593 = vunpack.c.h.b16 %v233
        %v594 = vunpack.c.l.b16 %v234
        %v595 = vunpack.c.h.b16 %v234
        %v596 = vunpack.c.l.b16 %v235
        %v597 = vunpack.c.h.b16 %v235
        %v598 = vunpack.c.l.b16 %v236
        %v599 = vunpack.c.h.b16 %v236
        %v600 = vunpack.c.l.b16 %v237
        %v601 = vunpack.c.h.b16 %v237
        %v602 = vunpack.c.l.b16 %v238
        %v603 = vunpack.c.h.b16 %v238
        %v604 = vunpack.c.l.b16 %v239
        %v605 = vunpack.c.h.b16 %v239
        %v606 = vunpack.c.l.b16 %v240
        %v607 = vunpack.c.h.b16 %v240
        %v608 = vunpack.c.l.b16 %v241
        %v609 = vunpack.c.h.b16 %v241
        %v610 = vunpack.c.l.b16 %v242
        %v611 = vunpack.c.h.b16 %v242
        %v612 = vunpack.c.l.b16 %v243
        %v613 = vunpack.c.h.b16 %v243
        %v614 = vpack.c.b16 %v584, %v582
        %v615 = vpack.c.b16 %v585, %v583
        %v616 = vpack.c.b16 %v588, %v586
        %v617 = vpack.c.b16 %v589, %v587
        %v618 = vpack.c.b16 %v592, %v590
        %v619 = vpack.c.b16 %v593, %v591
        %v620 = vpack.c.b16 %v596, %v594
        %v621 = vpack.c.b16 %v597, %v595
        %v622 = vpack.c.b16 %v600, %v598
        %v623 = vpack.c.b16 %v601, %v599
        %v624 = vpack.c.b16 %v604, %v602
        %v625 = vpack.c.b16 %v605, %v603
        %v626 = vpack.c.b16 %v608, %v606
        %v627 = vpack.c.b16 %v609, %v607
        %v628 = vpack.c.b16 %v612, %v610
        %v629 = vpack.c.b16 %v613, %v611
        %646 = vmatprep.subr.bf16.mxu0 %v615
        %647 = vmatpush1.bf16.msra.mxu0 %v614
        %648 = vmatprep.subr.bf16.mxu0 %v617
        %649 = vmatpush1.bf16.msra.mxu0 %v616
        %650 = vmatprep.subr.bf16.mxu0 %v619
        %651 = vmatpush1.bf16.msra.mxu0 %v618
        %652 = vmatprep.subr.bf16.mxu0 %v621
        %653 = vmatpush1.bf16.msra.mxu0 %v620
        %654 = vmatprep.subr.bf16.mxu0 %v623
        %655 = vmatpush1.bf16.msra.mxu0 %v622
        %656 = vmatprep.subr.bf16.mxu0 %v625
        %657 = vmatpush1.bf16.msra.mxu0 %v624
        %658 = vmatprep.subr.bf16.mxu0 %v627
        %659 = vmatpush1.bf16.msra.mxu0 %v626
        %660 = vmatprep.subr.bf16.mxu0 %v629
        %661 = vmatpush1.bf16.msra.mxu0 %v628
        %662 = vmatprep.subr.bf16.mxu0 0
        %663 = vmatpush1.bf16.msra.mxu0 0
        %664 = vmatprep.subr.bf16.mxu0 0
        %665 = vmatpush1.bf16.msra.mxu0 0
        %666 = vmatprep.subr.bf16.mxu0 0
        %667 = vmatpush1.bf16.msra.mxu0 0
        %668 = vmatprep.subr.bf16.mxu0 0
        %669 = vmatpush1.bf16.msra.mxu0 0
        %670 = vmatprep.subr.bf16.mxu0 0
        %671 = vmatpush1.bf16.msra.mxu0 0
        %672 = vmatprep.subr.bf16.mxu0 0
        %673 = vmatpush1.bf16.msra.mxu0 0
        %674 = vmatprep.subr.bf16.mxu0 0
        %675 = vmatpush1.bf16.msra.mxu0 0
        %676 = vmatprep.subr.bf16.mxu0 0
        %677 = vmatpush1.bf16.msra.mxu0 0
        %678 = vmatprep.mubr.bf16.mxu0 0
        %679 = vmatmul.mubr.bf16.gmra.mrb[0].mxu0 %v195
        %v680 = vpop.f32.mrb[0].mxu0
        %v681 = vadd.f32 0.0, %v680
        %v682 = vpop.f32.mrb[0].mxu0
        %v683 = vadd.f32 0.0, %v682
        %v684 = vpop.f32.mrb[0].mxu0
        %v685 = vpop.f32.mrb[0].mxu0
        %686 = vdwg.mxu0
        %v703 = vunpack.c.l.b16 %v244
        %v704 = vunpack.c.h.b16 %v244
        %v705 = vunpack.c.l.b16 %v245
        %v706 = vunpack.c.h.b16 %v245
        %v707 = vunpack.c.l.b16 %v246
        %v708 = vunpack.c.h.b16 %v246
        %v709 = vunpack.c.l.b16 %v247
        %v710 = vunpack.c.h.b16 %v247
        %v711 = vunpack.c.l.b16 %v248
        %v712 = vunpack.c.h.b16 %v248
        %v713 = vunpack.c.l.b16 %v249
        %v714 = vunpack.c.h.b16 %v249
        %v715 = vunpack.c.l.b16 %v250
        %v716 = vunpack.c.h.b16 %v250
        %v717 = vunpack.c.l.b16 %v251
        %v718 = vunpack.c.h.b16 %v251
        %v719 = vunpack.c.l.b16 %v252
        %v720 = vunpack.c.h.b16 %v252
        %v721 = vunpack.c.l.b16 %v253
        %v722 = vunpack.c.h.b16 %v253
        %v723 = vunpack.c.l.b16 %v254
        %v724 = vunpack.c.h.b16 %v254
        %v725 = vunpack.c.l.b16 %v255
        %v726 = vunpack.c.h.b16 %v255
        %v727 = vunpack.c.l.b16 %v256
        %v728 = vunpack.c.h.b16 %v256
        %v729 = vunpack.c.l.b16 %v257
        %v730 = vunpack.c.h.b16 %v257
        %v731 = vunpack.c.l.b16 %v258
        %v732 = vunpack.c.h.b16 %v258
        %v733 = vunpack.c.l.b16 %v259
        %v734 = vunpack.c.h.b16 %v259
        %v735 = vpack.c.b16 %v705, %v703
        %v736 = vpack.c.b16 %v706, %v704
        %v737 = vpack.c.b16 %v709, %v707
        %v738 = vpack.c.b16 %v710, %v708
        %v739 = vpack.c.b16 %v713, %v711
        %v740 = vpack.c.b16 %v714, %v712
        %v741 = vpack.c.b16 %v717, %v715
        %v742 = vpack.c.b16 %v718, %v716
        %v743 = vpack.c.b16 %v721, %v719
        %v744 = vpack.c.b16 %v722, %v720
        %v745 = vpack.c.b16 %v725, %v723
        %v746 = vpack.c.b16 %v726, %v724
        %v747 = vpack.c.b16 %v729, %v727
        %v748 = vpack.c.b16 %v730, %v728
        %v749 = vpack.c.b16 %v733, %v731
        %v750 = vpack.c.b16 %v734, %v732
        %767 = vmatprep.subr.bf16.mxu0 %v736
        %768 = vmatpush1.bf16.msra.mxu0 %v735
        %769 = vmatprep.subr.bf16.mxu0 %v738
        %770 = vmatpush1.bf16.msra.mxu0 %v737
        %771 = vmatprep.subr.bf16.mxu0 %v740
        %772 = vmatpush1.bf16.msra.mxu0 %v739
        %773 = vmatprep.subr.bf16.mxu0 %v742
        %774 = vmatpush1.bf16.msra.mxu0 %v741
        %775 = vmatprep.subr.bf16.mxu0 %v744
        %776 = vmatpush1.bf16.msra.mxu0 %v743
        %777 = vmatprep.subr.bf16.mxu0 %v746
        %778 = vmatpush1.bf16.msra.mxu0 %v745
        %779 = vmatprep.subr.bf16.mxu0 %v748
        %780 = vmatpush1.bf16.msra.mxu0 %v747
        %781 = vmatprep.subr.bf16.mxu0 %v750
        %782 = vmatpush1.bf16.msra.mxu0 %v749
        %783 = vmatprep.subr.bf16.mxu0 0
        %784 = vmatpush1.bf16.msra.mxu0 0
        %785 = vmatprep.subr.bf16.mxu0 0
        %786 = vmatpush1.bf16.msra.mxu0 0
        %787 = vmatprep.subr.bf16.mxu0 0
        %788 = vmatpush1.bf16.msra.mxu0 0
        %789 = vmatprep.subr.bf16.mxu0 0
        %790 = vmatpush1.bf16.msra.mxu0 0
        %791 = vmatprep.subr.bf16.mxu0 0
        %792 = vmatpush1.bf16.msra.mxu0 0
        %793 = vmatprep.subr.bf16.mxu0 0
        %794 = vmatpush1.bf16.msra.mxu0 0
        %795 = vmatprep.subr.bf16.mxu0 0
        %796 = vmatpush1.bf16.msra.mxu0 0
        %797 = vmatprep.subr.bf16.mxu0 0
        %798 = vmatpush1.bf16.msra.mxu0 0
        %799 = vmatprep.mubr.bf16.mxu0 0
        %800 = vmatmul.mubr.bf16.gmra.mrb[0].mxu0 %v195
        %v801 = vpop.f32.mrb[0].mxu0
        %v802 = vadd.f32 0.0, %v801
        %v803 = vpop.f32.mrb[0].mxu0
        %v804 = vadd.f32 0.0, %v803
        %v805 = vpop.f32.mrb[0].mxu0
        %v806 = vpop.f32.mrb[0].mxu0
        %807 = vdwg.mxu0
        %v824 = vunpack.c.l.b16 %v260
        %v825 = vunpack.c.h.b16 %v260
        %v826 = vunpack.c.l.b16 %v261
        %v827 = vunpack.c.h.b16 %v261
        %v828 = vunpack.c.l.b16 %v262
        %v829 = vunpack.c.h.b16 %v262
        %v830 = vunpack.c.l.b16 %v263
        %v831 = vunpack.c.h.b16 %v263
        %v832 = vunpack.c.l.b16 %v264
        %v833 = vunpack.c.h.b16 %v264
        %v834 = vunpack.c.l.b16 %v265
        %v835 = vunpack.c.h.b16 %v265
        %v836 = vunpack.c.l.b16 %v266
        %v837 = vunpack.c.h.b16 %v266
        %v838 = vunpack.c.l.b16 %v267
        %v839 = vunpack.c.h.b16 %v267
        %v840 = vunpack.c.l.b16 %v268
        %v841 = vunpack.c.h.b16 %v268
        %v842 = vunpack.c.l.b16 %v269
        %v843 = vunpack.c.h.b16 %v269
        %v844 = vunpack.c.l.b16 %v270
        %v845 = vunpack.c.h.b16 %v270
        %v846 = vunpack.c.l.b16 %v271
        %v847 = vunpack.c.h.b16 %v271
        %v848 = vunpack.c.l.b16 %v272
        %v849 = vunpack.c.h.b16 %v272
        %v850 = vunpack.c.l.b16 %v273
        %v851 = vunpack.c.h.b16 %v273
        %v852 = vunpack.c.l.b16 %v274
        %v853 = vunpack.c.h.b16 %v274
        %v854 = vunpack.c.l.b16 %v275
        %v855 = vunpack.c.h.b16 %v275
        %v856 = vpack.c.b16 %v826, %v824
        %v857 = vpack.c.b16 %v827, %v825
        %v858 = vpack.c.b16 %v830, %v828
        %v859 = vpack.c.b16 %v831, %v829
        %v860 = vpack.c.b16 %v834, %v832
        %v861 = vpack.c.b16 %v835, %v833
        %v862 = vpack.c.b16 %v838, %v836
        %v863 = vpack.c.b16 %v839, %v837
        %v864 = vpack.c.b16 %v842, %v840
        %v865 = vpack.c.b16 %v843, %v841
        %v866 = vpack.c.b16 %v846, %v844
        %v867 = vpack.c.b16 %v847, %v845
        %v868 = vpack.c.b16 %v850, %v848
        %v869 = vpack.c.b16 %v851, %v849
        %v870 = vpack.c.b16 %v854, %v852
        %v871 = vpack.c.b16 %v855, %v853
        %888 = vmatprep.subr.bf16.mxu0 %v857
        %889 = vmatpush1.bf16.msra.mxu0 %v856
        %890 = vmatprep.subr.bf16.mxu0 %v859
        %891 = vmatpush1.bf16.msra.mxu0 %v858
        %892 = vmatprep.subr.bf16.mxu0 %v861
        %893 = vmatpush1.bf16.msra.mxu0 %v860
        %894 = vmatprep.subr.bf16.mxu0 %v863
        %895 = vmatpush1.bf16.msra.mxu0 %v862
        %896 = vmatprep.subr.bf16.mxu0 %v865
        %897 = vmatpush1.bf16.msra.mxu0 %v864
        %898 = vmatprep.subr.bf16.mxu0 %v867
        %899 = vmatpush1.bf16.msra.mxu0 %v866
        %900 = vmatprep.subr.bf16.mxu0 %v869
        %901 = vmatpush1.bf16.msra.mxu0 %v868
        %902 = vmatprep.subr.bf16.mxu0 %v871
        %903 = vmatpush1.bf16.msra.mxu0 %v870
        %904 = vmatprep.subr.bf16.mxu0 0
        %905 = vmatpush1.bf16.msra.mxu0 0
        %906 = vmatprep.subr.bf16.mxu0 0
        %907 = vmatpush1.bf16.msra.mxu0 0
        %908 = vmatprep.subr.bf16.mxu0 0
        %909 = vmatpush1.bf16.msra.mxu0 0
        %910 = vmatprep.subr.bf16.mxu0 0
        %911 = vmatpush1.bf16.msra.mxu0 0
        %912 = vmatprep.subr.bf16.mxu0 0
        %913 = vmatpush1.bf16.msra.mxu0 0
        %914 = vmatprep.subr.bf16.mxu0 0
        %915 = vmatpush1.bf16.msra.mxu0 0
        %916 = vmatprep.subr.bf16.mxu0 0
        %917 = vmatpush1.bf16.msra.mxu0 0
        %918 = vmatprep.subr.bf16.mxu0 0
        %919 = vmatpush1.bf16.msra.mxu0 0
        %920 = vmatprep.mubr.bf16.mxu0 0
        %921 = vmatmul.mubr.bf16.gmra.mrb[0].mxu0 %v195
        %v922 = vpop.f32.mrb[0].mxu0
        %v923 = vadd.f32 0.0, %v922
        %v924 = vpop.f32.mrb[0].mxu0
        %v925 = vadd.f32 0.0, %v924
        %v926 = vpop.f32.mrb[0].mxu0
        %v927 = vpop.f32.mrb[0].mxu0
        %928 = vdwg.mxu0
        %v945 = vunpack.c.l.b16 %v276
        %v946 = vunpack.c.h.b16 %v276
        %v947 = vunpack.c.l.b16 %v277
        %v948 = vunpack.c.h.b16 %v277
        %v949 = vunpack.c.l.b16 %v278
        %v950 = vunpack.c.h.b16 %v278
        %v951 = vunpack.c.l.b16 %v279
        %v952 = vunpack.c.h.b16 %v279
        %v953 = vunpack.c.l.b16 %v280
        %v954 = vunpack.c.h.b16 %v280
        %v955 = vunpack.c.l.b16 %v281
        %v956 = vunpack.c.h.b16 %v281
        %v957 = vunpack.c.l.b16 %v282
        %v958 = vunpack.c.h.b16 %v282
        %v959 = vunpack.c.l.b16 %v283
        %v960 = vunpack.c.h.b16 %v283
        %v961 = vunpack.c.l.b16 %v284
        %v962 = vunpack.c.h.b16 %v284
        %v963 = vunpack.c.l.b16 %v285
        %v964 = vunpack.c.h.b16 %v285
        %v965 = vunpack.c.l.b16 %v286
        %v966 = vunpack.c.h.b16 %v286
        %v967 = vunpack.c.l.b16 %v287
        %v968 = vunpack.c.h.b16 %v287
        %v969 = vunpack.c.l.b16 %v288
        %v970 = vunpack.c.h.b16 %v288
        %v971 = vunpack.c.l.b16 %v289
        %v972 = vunpack.c.h.b16 %v289
        %v973 = vunpack.c.l.b16 %v290
        %v974 = vunpack.c.h.b16 %v290
        %v975 = vunpack.c.l.b16 %v291
        %v976 = vunpack.c.h.b16 %v291
        %v977 = vpack.c.b16 %v947, %v945
        %v978 = vpack.c.b16 %v948, %v946
        %v979 = vpack.c.b16 %v951, %v949
        %v980 = vpack.c.b16 %v952, %v950
        %v981 = vpack.c.b16 %v955, %v953
        %v982 = vpack.c.b16 %v956, %v954
        %v983 = vpack.c.b16 %v959, %v957
        %v984 = vpack.c.b16 %v960, %v958
        %v985 = vpack.c.b16 %v963, %v961
        %v986 = vpack.c.b16 %v964, %v962
        %v987 = vpack.c.b16 %v967, %v965
        %v988 = vpack.c.b16 %v968, %v966
        %v989 = vpack.c.b16 %v971, %v969
        %v990 = vpack.c.b16 %v972, %v970
        %v991 = vpack.c.b16 %v975, %v973
        %v992 = vpack.c.b16 %v976, %v974
        %1009 = vmatprep.subr.bf16.mxu0 %v978
        %1010 = vmatpush1.bf16.msra.mxu0 %v977
        %1011 = vmatprep.subr.bf16.mxu0 %v980
        %1012 = vmatpush1.bf16.msra.mxu0 %v979
        %1013 = vmatprep.subr.bf16.mxu0 %v982
        %1014 = vmatpush1.bf16.msra.mxu0 %v981
        %1015 = vmatprep.subr.bf16.mxu0 %v984
        %1016 = vmatpush1.bf16.msra.mxu0 %v983
        %1017 = vmatprep.subr.bf16.mxu0 %v986
        %1018 = vmatpush1.bf16.msra.mxu0 %v985
        %1019 = vmatprep.subr.bf16.mxu0 %v988
        %1020 = vmatpush1.bf16.msra.mxu0 %v987
        %1021 = vmatprep.subr.bf16.mxu0 %v990
        %1022 = vmatpush1.bf16.msra.mxu0 %v989
        %1023 = vmatprep.subr.bf16.mxu0 %v992
        %1024 = vmatpush1.bf16.msra.mxu0 %v991
        %1025 = vmatprep.subr.bf16.mxu0 0
        %1026 = vmatpush1.bf16.msra.mxu0 0
        %1027 = vmatprep.subr.bf16.mxu0 0
        %1028 = vmatpush1.bf16.msra.mxu0 0
        %1029 = vmatprep.subr.bf16.mxu0 0
        %1030 = vmatpush1.bf16.msra.mxu0 0
        %1031 = vmatprep.subr.bf16.mxu0 0
        %1032 = vmatpush1.bf16.msra.mxu0 0
        %1033 = vmatprep.subr.bf16.mxu0 0
        %1034 = vmatpush1.bf16.msra.mxu0 0
        %1035 = vmatprep.subr.bf16.mxu0 0
        %1036 = vmatpush1.bf16.msra.mxu0 0
        %1037 = vmatprep.subr.bf16.mxu0 0
        %1038 = vmatpush1.bf16.msra.mxu0 0
        %1039 = vmatprep.subr.bf16.mxu0 0
        %1040 = vmatpush1.bf16.msra.mxu0 0
        %1041 = vmatprep.mubr.bf16.mxu0 0
        %1042 = vmatmul.mubr.bf16.gmra.mrb[0].mxu0 %v195
        %v1043 = vpop.f32.mrb[0].mxu0
        %v1044 = vadd.f32 0.0, %v1043
        %v1045 = vpop.f32.mrb[0].mxu0
        %v1046 = vadd.f32 0.0, %v1045
        %v1047 = vpop.f32.mrb[0].mxu0
        %v1048 = vpop.f32.mrb[0].mxu0
        %1049 = vdwg.mxu0
        %v1066 = vunpack.c.l.b16 %v292
        %v1067 = vunpack.c.h.b16 %v292
        %v1068 = vunpack.c.l.b16 %v293
        %v1069 = vunpack.c.h.b16 %v293
        %v1070 = vunpack.c.l.b16 %v294
        %v1071 = vunpack.c.h.b16 %v294
        %v1072 = vunpack.c.l.b16 %v295
        %v1073 = vunpack.c.h.b16 %v295
        %v1074 = vunpack.c.l.b16 %v296
        %v1075 = vunpack.c.h.b16 %v296
        %v1076 = vunpack.c.l.b16 %v297
        %v1077 = vunpack.c.h.b16 %v297
        %v1078 = vunpack.c.l.b16 %v298
        %v1079 = vunpack.c.h.b16 %v298
        %v1080 = vunpack.c.l.b16 %v299
        %v1081 = vunpack.c.h.b16 %v299
        %v1082 = vunpack.c.l.b16 %v300
        %v1083 = vunpack.c.h.b16 %v300
        %v1084 = vunpack.c.l.b16 %v301
        %v1085 = vunpack.c.h.b16 %v301
        %v1086 = vunpack.c.l.b16 %v302
        %v1087 = vunpack.c.h.b16 %v302
        %v1088 = vunpack.c.l.b16 %v303
        %v1089 = vunpack.c.h.b16 %v303
        %v1090 = vunpack.c.l.b16 %v304
        %v1091 = vunpack.c.h.b16 %v304
        %v1092 = vunpack.c.l.b16 %v305
        %v1093 = vunpack.c.h.b16 %v305
        %v1094 = vunpack.c.l.b16 %v306
        %v1095 = vunpack.c.h.b16 %v306
        %v1096 = vunpack.c.l.b16 %v307
        %v1097 = vunpack.c.h.b16 %v307
        %v1098 = vpack.c.b16 %v1068, %v1066
        %v1099 = vpack.c.b16 %v1069, %v1067
        %v1100 = vpack.c.b16 %v1072, %v1070
        %v1101 = vpack.c.b16 %v1073, %v1071
        %v1102 = vpack.c.b16 %v1076, %v1074
        %v1103 = vpack.c.b16 %v1077, %v1075
        %v1104 = vpack.c.b16 %v1080, %v1078
        %v1105 = vpack.c.b16 %v1081, %v1079
        %v1106 = vpack.c.b16 %v1084, %v1082
        %v1107 = vpack.c.b16 %v1085, %v1083
        %v1108 = vpack.c.b16 %v1088, %v1086
        %v1109 = vpack.c.b16 %v1089, %v1087
        %v1110 = vpack.c.b16 %v1092, %v1090
        %v1111 = vpack.c.b16 %v1093, %v1091
        %v1112 = vpack.c.b16 %v1096, %v1094
        %v1113 = vpack.c.b16 %v1097, %v1095
        %1130 = vmatprep.subr.bf16.mxu0 %v1099
        %1131 = vmatpush1.bf16.msra.mxu0 %v1098
        %1132 = vmatprep.subr.bf16.mxu0 %v1101
        %1133 = vmatpush1.bf16.msra.mxu0 %v1100
        %1134 = vmatprep.subr.bf16.mxu0 %v1103
        %1135 = vmatpush1.bf16.msra.mxu0 %v1102
        %1136 = vmatprep.subr.bf16.mxu0 %v1105
        %1137 = vmatpush1.bf16.msra.mxu0 %v1104
        %1138 = vmatprep.subr.bf16.mxu0 %v1107
        %1139 = vmatpush1.bf16.msra.mxu0 %v1106
        %1140 = vmatprep.subr.bf16.mxu0 %v1109
        %1141 = vmatpush1.bf16.msra.mxu0 %v1108
        %1142 = vmatprep.subr.bf16.mxu0 %v1111
        %1143 = vmatpush1.bf16.msra.mxu0 %v1110
        %1144 = vmatprep.subr.bf16.mxu0 %v1113
        %1145 = vmatpush1.bf16.msra.mxu0 %v1112
        %1146 = vmatprep.subr.bf16.mxu0 0
        %1147 = vmatpush1.bf16.msra.mxu0 0
        %1148 = vmatprep.subr.bf16.mxu0 0
        %1149 = vmatpush1.bf16.msra.mxu0 0
        %1150 = vmatprep.subr.bf16.mxu0 0
        %1151 = vmatpush1.bf16.msra.mxu0 0
        %1152 = vmatprep.subr.bf16.mxu0 0
        %1153 = vmatpush1.bf16.msra.mxu0 0
        %1154 = vmatprep.subr.bf16.mxu0 0
        %1155 = vmatpush1.bf16.msra.mxu0 0
        %1156 = vmatprep.subr.bf16.mxu0 0
        %1157 = vmatpush1.bf16.msra.mxu0 0
        %1158 = vmatprep.subr.bf16.mxu0 0
        %1159 = vmatpush1.bf16.msra.mxu0 0
        %1160 = vmatprep.subr.bf16.mxu0 0
        %1161 = vmatpush1.bf16.msra.mxu0 0
        %1162 = vmatprep.mubr.bf16.mxu0 0
        %1163 = vmatmul.mubr.bf16.gmra.mrb[0].mxu0 %v195
        %v1164 = vpop.f32.mrb[0].mxu0
        %v1165 = vadd.f32 0.0, %v1164
        %v1166 = vpop.f32.mrb[0].mxu0
        %v1167 = vadd.f32 0.0, %v1166
        %v1168 = vpop.f32.mrb[0].mxu0
        %v1169 = vpop.f32.mrb[0].mxu0
        %1170 = vdwg.mxu0
        %v1187 = vunpack.c.l.b16 %v308
        %v1188 = vunpack.c.h.b16 %v308
        %v1189 = vunpack.c.l.b16 %v309
        %v1190 = vunpack.c.h.b16 %v309
        %v1191 = vunpack.c.l.b16 %v310
        %v1192 = vunpack.c.h.b16 %v310
        %v1193 = vunpack.c.l.b16 %v311
        %v1194 = vunpack.c.h.b16 %v311
        %v1195 = vunpack.c.l.b16 %v312
        %v1196 = vunpack.c.h.b16 %v312
        %v1197 = vunpack.c.l.b16 %v313
        %v1198 = vunpack.c.h.b16 %v313
        %v1199 = vunpack.c.l.b16 %v314
        %v1200 = vunpack.c.h.b16 %v314
        %v1201 = vunpack.c.l.b16 %v315
        %v1202 = vunpack.c.h.b16 %v315
        %v1203 = vunpack.c.l.b16 %v316
        %v1204 = vunpack.c.h.b16 %v316
        %v1205 = vunpack.c.l.b16 %v317
        %v1206 = vunpack.c.h.b16 %v317
        %v1207 = vunpack.c.l.b16 %v318
        %v1208 = vunpack.c.h.b16 %v318
        %v1209 = vunpack.c.l.b16 %v319
        %v1210 = vunpack.c.h.b16 %v319
        %v1211 = vunpack.c.l.b16 %v320
        %v1212 = vunpack.c.h.b16 %v320
        %v1213 = vunpack.c.l.b16 %v321
        %v1214 = vunpack.c.h.b16 %v321
        %v1215 = vunpack.c.l.b16 %v322
        %v1216 = vunpack.c.h.b16 %v322
        %v1217 = vunpack.c.l.b16 %v323
        %v1218 = vunpack.c.h.b16 %v323
        %v1219 = vpack.c.b16 %v1189, %v1187
        %v1220 = vpack.c.b16 %v1190, %v1188
        %v1221 = vpack.c.b16 %v1193, %v1191
        %v1222 = vpack.c.b16 %v1194, %v1192
        %v1223 = vpack.c.b16 %v1197, %v1195
        %v1224 = vpack.c.b16 %v1198, %v1196
        %v1225 = vpack.c.b16 %v1201, %v1199
        %v1226 = vpack.c.b16 %v1202, %v1200
        %v1227 = vpack.c.b16 %v1205, %v1203
        %v1228 = vpack.c.b16 %v1206, %v1204
        %v1229 = vpack.c.b16 %v1209, %v1207
        %v1230 = vpack.c.b16 %v1210, %v1208
        %v1231 = vpack.c.b16 %v1213, %v1211
        %v1232 = vpack.c.b16 %v1214, %v1212
        %v1233 = vpack.c.b16 %v1217, %v1215
        %v1234 = vpack.c.b16 %v1218, %v1216
        %1251 = vmatprep.subr.bf16.mxu0 %v1220
        %1252 = vmatpush1.bf16.msra.mxu0 %v1219
        %1253 = vmatprep.subr.bf16.mxu0 %v1222
        %1254 = vmatpush1.bf16.msra.mxu0 %v1221
        %1255 = vmatprep.subr.bf16.mxu0 %v1224
        %1256 = vmatpush1.bf16.msra.mxu0 %v1223
        %1257 = vmatprep.subr.bf16.mxu0 %v1226
        %1258 = vmatpush1.bf16.msra.mxu0 %v1225
        %1259 = vmatprep.subr.bf16.mxu0 %v1228
        %1260 = vmatpush1.bf16.msra.mxu0 %v1227
        %1261 = vmatprep.subr.bf16.mxu0 %v1230
        %1262 = vmatpush1.bf16.msra.mxu0 %v1229
        %1263 = vmatprep.subr.bf16.mxu0 %v1232
        %1264 = vmatpush1.bf16.msra.mxu0 %v1231
        %1265 = vmatprep.subr.bf16.mxu0 %v1234
        %1266 = vmatpush1.bf16.msra.mxu0 %v1233
        %1267 = vmatprep.subr.bf16.mxu0 0
        %1268 = vmatpush1.bf16.msra.mxu0 0
        %1269 = vmatprep.subr.bf16.mxu0 0
        %1270 = vmatpush1.bf16.msra.mxu0 0
        %1271 = vmatprep.subr.bf16.mxu0 0
        %1272 = vmatpush1.bf16.msra.mxu0 0
        %1273 = vmatprep.subr.bf16.mxu0 0
        %1274 = vmatpush1.bf16.msra.mxu0 0
        %1275 = vmatprep.subr.bf16.mxu0 0
        %1276 = vmatpush1.bf16.msra.mxu0 0
        %1277 = vmatprep.subr.bf16.mxu0 0
        %1278 = vmatpush1.bf16.msra.mxu0 0
        %1279 = vmatprep.subr.bf16.mxu0 0
        %1280 = vmatpush1.bf16.msra.mxu0 0
        %1281 = vmatprep.subr.bf16.mxu0 0
        %1282 = vmatpush1.bf16.msra.mxu0 0
        %1283 = vmatprep.mubr.bf16.mxu0 0
        %1284 = vmatmul.mubr.bf16.gmra.mrb[0].mxu0 %v195
        %v1285 = vpop.f32.mrb[0].mxu0
        %v1286 = vadd.f32 0.0, %v1285
        %v1287 = vpop.f32.mrb[0].mxu0
        %v1288 = vadd.f32 0.0, %v1287
        %v1289 = vpop.f32.mrb[0].mxu0
        %v1290 = vpop.f32.mrb[0].mxu0
        %1291 = vdwg.mxu0
        %v1292 = vpack.c.bf16 %v439, %v439
        %v1293 = vpack.c.bf16 %v560, %v560
        %v1294 = vpack.c.bf16 %v681, %v681
        %v1295 = vpack.c.bf16 %v802, %v802
        %v1296 = vpack.c.bf16 %v923, %v923
        %v1297 = vpack.c.bf16 %v1044, %v1044
        %v1298 = vpack.c.bf16 %v1165, %v1165
        %v1299 = vpack.c.bf16 %v1286, %v1286
        %v1300 = vpack.c.bf16 %v441, %v441
        %v1301 = vpack.c.bf16 %v562, %v562
        %v1302 = vpack.c.bf16 %v683, %v683
        %v1303 = vpack.c.bf16 %v804, %v804
        %v1304 = vpack.c.bf16 %v925, %v925
        %v1305 = vpack.c.bf16 %v1046, %v1046
        %v1306 = vpack.c.bf16 %v1167, %v1167
        %v1307 = vpack.c.bf16 %v1288, %v1288
        %1309 = vrot.lane.b32.xlu0 %v1292, 64
        %v1310 = vpop.permute.xlu0 %1309
        %vm1311 = vcmask 523264
        %v1313 = vsel %vm1311, %v1292, 0
        %v1316 = vsel %vm1311, %v1310, 0
        %1318 = vmatprep.subr.bf16.mxu0 0
        %1319 = vmatpush1.bf16.xpose.msra.mxu0 %v1316
        %1320 = vmatprep.subr.bf16.mxu0 0
        %1321 = vmatpush1.bf16.xpose.msra.mxu0 0
        %1322 = vmatprep.subr.bf16.mxu0 0
        %1323 = vmatpush1.bf16.xpose.msra.mxu0 0
        %1324 = vmatprep.subr.bf16.mxu0 0
        %1325 = vmatpush1.bf16.xpose.msra.mxu0 0
        %1326 = vmatprep.subr.bf16.mxu0 0
        %1327 = vmatpush1.bf16.xpose.msra.mxu0 0
        %1328 = vmatprep.subr.bf16.mxu0 0
        %1329 = vmatpush1.bf16.xpose.msra.mxu0 0
        %1330 = vmatprep.subr.bf16.mxu0 0
        %1331 = vmatpush1.bf16.xpose.msra.mxu0 0
        %1332 = vmatprep.subr.bf16.mxu0 0
        %1333 = vmatpush1.bf16.xpose.msra.mxu0 0
        %1334 = vmatprep.subr.bf16.mxu0 0
        %1335 = vmatpush1.bf16.xpose.msra.mxu0 0
        %1336 = vmatprep.subr.bf16.mxu0 0
        %1337 = vmatpush1.bf16.xpose.msra.mxu0 0
        %1338 = vmatprep.subr.bf16.mxu0 0
        %1339 = vmatpush1.bf16.xpose.msra.mxu0 0
        %1340 = vmatprep.subr.bf16.mxu0 0
        %1341 = vmatpush1.bf16.xpose.msra.mxu0 0
        %1342 = vmatprep.subr.bf16.mxu0 0
        %1343 = vmatpush1.bf16.xpose.msra.mxu0 0
        %1344 = vmatprep.subr.bf16.mxu0 0
        %1345 = vmatpush1.bf16.xpose.msra.mxu0 0
        %1346 = vmatprep.subr.bf16.mxu0 0
        %1347 = vmatpush1.bf16.xpose.msra.mxu0 0
        %1348 = vmatprep.subr.bf16.mxu0 0
        %1349 = vmatpush1.bf16.xpose.msra.mxu0 0
        %1350 = vmatprep.mubr.bf16.mxu0 0
        %1351 = vmatmul.mubr.bf16.gmra.mrb[0].mxu0 %v1313
        %v1352 = vpop.f32.mrb[0].mxu0
        %v1353 = vadd.f32 0.0, %v1352
        %v1354 = vpop.f32.mrb[0].mxu0
        %v1355 = vpop.f32.mrb[0].mxu0
        %v1356 = vpop.f32.mrb[0].mxu0
        %1357 = vdwg.mxu0
        %1359 = vrot.lane.b32.xlu0 %v1293, 64
        %v1360 = vpop.permute.xlu0 %1359
        %v1362 = vsel %vm1311, %v1293, 0
        %v1365 = vsel %vm1311, %v1360, 0
        %1367 = vmatprep.subr.bf16.mxu0 0
        %1368 = vmatpush1.bf16.xpose.msra.mxu0 %v1365
        %1369 = vmatprep.subr.bf16.mxu0 0
        %1370 = vmatpush1.bf16.xpose.msra.mxu0 0
        %1371 = vmatprep.subr.bf16.mxu0 0
        %1372 = vmatpush1.bf16.xpose.msra.mxu0 0
        %1373 = vmatprep.subr.bf16.mxu0 0
        %1374 = vmatpush1.bf16.xpose.msra.mxu0 0
        %1375 = vmatprep.subr.bf16.mxu0 0
        %1376 = vmatpush1.bf16.xpose.msra.mxu0 0
        %1377 = vmatprep.subr.bf16.mxu0 0
        %1378 = vmatpush1.bf16.xpose.msra.mxu0 0
        %1379 = vmatprep.subr.bf16.mxu0 0
        %1380 = vmatpush1.bf16.xpose.msra.mxu0 0
        %1381 = vmatprep.subr.bf16.mxu0 0
        %1382 = vmatpush1.bf16.xpose.msra.mxu0 0
        %1383 = vmatprep.subr.bf16.mxu0 0
        %1384 = vmatpush1.bf16.xpose.msra.mxu0 0
        %1385 = vmatprep.subr.bf16.mxu0 0
        %1386 = vmatpush1.bf16.xpose.msra.mxu0 0
        %1387 = vmatprep.subr.bf16.mxu0 0
        %1388 = vmatpush1.bf16.xpose.msra.mxu0 0
        %1389 = vmatprep.subr.bf16.mxu0 0
        %1390 = vmatpush1.bf16.xpose.msra.mxu0 0
        %1391 = vmatprep.subr.bf16.mxu0 0
        %1392 = vmatpush1.bf16.xpose.msra.mxu0 0
        %1393 = vmatprep.subr.bf16.mxu0 0
        %1394 = vmatpush1.bf16.xpose.msra.mxu0 0
        %1395 = vmatprep.subr.bf16.mxu0 0
        %1396 = vmatpush1.bf16.xpose.msra.mxu0 0
        %1397 = vmatprep.subr.bf16.mxu0 0
        %1398 = vmatpush1.bf16.xpose.msra.mxu0 0
        %1399 = vmatprep.mubr.bf16.mxu0 0
        %1400 = vmatmul.mubr.bf16.gmra.mrb[0].mxu0 %v1362
        %v1401 = vpop.f32.mrb[0].mxu0
        %v1402 = vadd.f32 0.0, %v1401
        %v1403 = vpop.f32.mrb[0].mxu0
        %v1404 = vpop.f32.mrb[0].mxu0
        %v1405 = vpop.f32.mrb[0].mxu0
        %1406 = vdwg.mxu0
        %1408 = vrot.lane.b32.xlu0 %v1294, 64
        %v1409 = vpop.permute.xlu0 %1408
        %v1411 = vsel %vm1311, %v1294, 0
        %v1414 = vsel %vm1311, %v1409, 0
        %1416 = vmatprep.subr.bf16.mxu0 0
        %1417 = vmatpush1.bf16.xpose.msra.mxu0 %v1414
        %1418 = vmatprep.subr.bf16.mxu0 0
        %1419 = vmatpush1.bf16.xpose.msra.mxu0 0
        %1420 = vmatprep.subr.bf16.mxu0 0
        %1421 = vmatpush1.bf16.xpose.msra.mxu0 0
        %1422 = vmatprep.subr.bf16.mxu0 0
        %1423 = vmatpush1.bf16.xpose.msra.mxu0 0
        %1424 = vmatprep.subr.bf16.mxu0 0
        %1425 = vmatpush1.bf16.xpose.msra.mxu0 0
        %1426 = vmatprep.subr.bf16.mxu0 0
        %1427 = vmatpush1.bf16.xpose.msra.mxu0 0
        %1428 = vmatprep.subr.bf16.mxu0 0
        %1429 = vmatpush1.bf16.xpose.msra.mxu0 0
        %1430 = vmatprep.subr.bf16.mxu0 0
        %1431 = vmatpush1.bf16.xpose.msra.mxu0 0
        %1432 = vmatprep.subr.bf16.mxu0 0
        %1433 = vmatpush1.bf16.xpose.msra.mxu0 0
        %1434 = vmatprep.subr.bf16.mxu0 0
        %1435 = vmatpush1.bf16.xpose.msra.mxu0 0
        %1436 = vmatprep.subr.bf16.mxu0 0
        %1437 = vmatpush1.bf16.xpose.msra.mxu0 0
        %1438 = vmatprep.subr.bf16.mxu0 0
        %1439 = vmatpush1.bf16.xpose.msra.mxu0 0
        %1440 = vmatprep.subr.bf16.mxu0 0
        %1441 = vmatpush1.bf16.xpose.msra.mxu0 0
        %1442 = vmatprep.subr.bf16.mxu0 0
        %1443 = vmatpush1.bf16.xpose.msra.mxu0 0
        %1444 = vmatprep.subr.bf16.mxu0 0
        %1445 = vmatpush1.bf16.xpose.msra.mxu0 0
        %1446 = vmatprep.subr.bf16.mxu0 0
        %1447 = vmatpush1.bf16.xpose.msra.mxu0 0
        %1448 = vmatprep.mubr.bf16.mxu0 0
        %1449 = vmatmul.mubr.bf16.gmra.mrb[0].mxu0 %v1411
        %v1450 = vpop.f32.mrb[0].mxu0
        %v1451 = vadd.f32 0.0, %v1450
        %v1452 = vpop.f32.mrb[0].mxu0
        %v1453 = vpop.f32.mrb[0].mxu0
        %v1454 = vpop.f32.mrb[0].mxu0
        %1455 = vdwg.mxu0
        %1457 = vrot.lane.b32.xlu0 %v1295, 64
        %v1458 = vpop.permute.xlu0 %1457
        %v1460 = vsel %vm1311, %v1295, 0
        %v1463 = vsel %vm1311, %v1458, 0
        %1465 = vmatprep.subr.bf16.mxu0 0
        %1466 = vmatpush1.bf16.xpose.msra.mxu0 %v1463
        %1467 = vmatprep.subr.bf16.mxu0 0
        %1468 = vmatpush1.bf16.xpose.msra.mxu0 0
        %1469 = vmatprep.subr.bf16.mxu0 0
        %1470 = vmatpush1.bf16.xpose.msra.mxu0 0
        %1471 = vmatprep.subr.bf16.mxu0 0
        %1472 = vmatpush1.bf16.xpose.msra.mxu0 0
        %1473 = vmatprep.subr.bf16.mxu0 0
        %1474 = vmatpush1.bf16.xpose.msra.mxu0 0
        %1475 = vmatprep.subr.bf16.mxu0 0
        %1476 = vmatpush1.bf16.xpose.msra.mxu0 0
        %1477 = vmatprep.subr.bf16.mxu0 0
        %1478 = vmatpush1.bf16.xpose.msra.mxu0 0
        %1479 = vmatprep.subr.bf16.mxu0 0
        %1480 = vmatpush1.bf16.xpose.msra.mxu0 0
        %1481 = vmatprep.subr.bf16.mxu0 0
        %1482 = vmatpush1.bf16.xpose.msra.mxu0 0
        %1483 = vmatprep.subr.bf16.mxu0 0
        %1484 = vmatpush1.bf16.xpose.msra.mxu0 0
        %1485 = vmatprep.subr.bf16.mxu0 0
        %1486 = vmatpush1.bf16.xpose.msra.mxu0 0
        %1487 = vmatprep.subr.bf16.mxu0 0
        %1488 = vmatpush1.bf16.xpose.msra.mxu0 0
        %1489 = vmatprep.subr.bf16.mxu0 0
        %1490 = vmatpush1.bf16.xpose.msra.mxu0 0
        %1491 = vmatprep.subr.bf16.mxu0 0
        %1492 = vmatpush1.bf16.xpose.msra.mxu0 0
        %1493 = vmatprep.subr.bf16.mxu0 0
        %1494 = vmatpush1.bf16.xpose.msra.mxu0 0
        %1495 = vmatprep.subr.bf16.mxu0 0
        %1496 = vmatpush1.bf16.xpose.msra.mxu0 0
        %1497 = vmatprep.mubr.bf16.mxu0 0
        %1498 = vmatmul.mubr.bf16.gmra.mrb[0].mxu0 %v1460
        %v1499 = vpop.f32.mrb[0].mxu0
        %v1500 = vadd.f32 0.0, %v1499
        %v1501 = vpop.f32.mrb[0].mxu0
        %v1502 = vpop.f32.mrb[0].mxu0
        %v1503 = vpop.f32.mrb[0].mxu0
        %1504 = vdwg.mxu0
        %1506 = vrot.lane.b32.xlu0 %v1296, 64
        %v1507 = vpop.permute.xlu0 %1506
        %v1509 = vsel %vm1311, %v1296, 0
        %v1512 = vsel %vm1311, %v1507, 0
        %1514 = vmatprep.subr.bf16.mxu0 0
        %1515 = vmatpush1.bf16.xpose.msra.mxu0 %v1512
        %1516 = vmatprep.subr.bf16.mxu0 0
        %1517 = vmatpush1.bf16.xpose.msra.mxu0 0
        %1518 = vmatprep.subr.bf16.mxu0 0
        %1519 = vmatpush1.bf16.xpose.msra.mxu0 0
        %1520 = vmatprep.subr.bf16.mxu0 0
        %1521 = vmatpush1.bf16.xpose.msra.mxu0 0
        %1522 = vmatprep.subr.bf16.mxu0 0
        %1523 = vmatpush1.bf16.xpose.msra.mxu0 0
        %1524 = vmatprep.subr.bf16.mxu0 0
        %1525 = vmatpush1.bf16.xpose.msra.mxu0 0
        %1526 = vmatprep.subr.bf16.mxu0 0
        %1527 = vmatpush1.bf16.xpose.msra.mxu0 0
        %1528 = vmatprep.subr.bf16.mxu0 0
        %1529 = vmatpush1.bf16.xpose.msra.mxu0 0
        %1530 = vmatprep.subr.bf16.mxu0 0
        %1531 = vmatpush1.bf16.xpose.msra.mxu0 0
        %1532 = vmatprep.subr.bf16.mxu0 0
        %1533 = vmatpush1.bf16.xpose.msra.mxu0 0
        %1534 = vmatprep.subr.bf16.mxu0 0
        %1535 = vmatpush1.bf16.xpose.msra.mxu0 0
        %1536 = vmatprep.subr.bf16.mxu0 0
        %1537 = vmatpush1.bf16.xpose.msra.mxu0 0
        %1538 = vmatprep.subr.bf16.mxu0 0
        %1539 = vmatpush1.bf16.xpose.msra.mxu0 0
        %1540 = vmatprep.subr.bf16.mxu0 0
        %1541 = vmatpush1.bf16.xpose.msra.mxu0 0
        %1542 = vmatprep.subr.bf16.mxu0 0
        %1543 = vmatpush1.bf16.xpose.msra.mxu0 0
        %1544 = vmatprep.subr.bf16.mxu0 0
        %1545 = vmatpush1.bf16.xpose.msra.mxu0 0
        %1546 = vmatprep.mubr.bf16.mxu0 0
        %1547 = vmatmul.mubr.bf16.gmra.mrb[0].mxu0 %v1509
        %v1548 = vpop.f32.mrb[0].mxu0
        %v1549 = vadd.f32 0.0, %v1548
        %v1550 = vpop.f32.mrb[0].mxu0
        %v1551 = vpop.f32.mrb[0].mxu0
        %v1552 = vpop.f32.mrb[0].mxu0
        %1553 = vdwg.mxu0
        %1555 = vrot.lane.b32.xlu0 %v1297, 64
        %v1556 = vpop.permute.xlu0 %1555
        %v1558 = vsel %vm1311, %v1297, 0
        %v1561 = vsel %vm1311, %v1556, 0
        %1563 = vmatprep.subr.bf16.mxu0 0
        %1564 = vmatpush1.bf16.xpose.msra.mxu0 %v1561
        %1565 = vmatprep.subr.bf16.mxu0 0
        %1566 = vmatpush1.bf16.xpose.msra.mxu0 0
        %1567 = vmatprep.subr.bf16.mxu0 0
        %1568 = vmatpush1.bf16.xpose.msra.mxu0 0
        %1569 = vmatprep.subr.bf16.mxu0 0
        %1570 = vmatpush1.bf16.xpose.msra.mxu0 0
        %1571 = vmatprep.subr.bf16.mxu0 0
        %1572 = vmatpush1.bf16.xpose.msra.mxu0 0
        %1573 = vmatprep.subr.bf16.mxu0 0
        %1574 = vmatpush1.bf16.xpose.msra.mxu0 0
        %1575 = vmatprep.subr.bf16.mxu0 0
        %1576 = vmatpush1.bf16.xpose.msra.mxu0 0
        %1577 = vmatprep.subr.bf16.mxu0 0
        %1578 = vmatpush1.bf16.xpose.msra.mxu0 0
        %1579 = vmatprep.subr.bf16.mxu0 0
        %1580 = vmatpush1.bf16.xpose.msra.mxu0 0
        %1581 = vmatprep.subr.bf16.mxu0 0
        %1582 = vmatpush1.bf16.xpose.msra.mxu0 0
        %1583 = vmatprep.subr.bf16.mxu0 0
        %1584 = vmatpush1.bf16.xpose.msra.mxu0 0
        %1585 = vmatprep.subr.bf16.mxu0 0
        %1586 = vmatpush1.bf16.xpose.msra.mxu0 0
        %1587 = vmatprep.subr.bf16.mxu0 0
        %1588 = vmatpush1.bf16.xpose.msra.mxu0 0
        %1589 = vmatprep.subr.bf16.mxu0 0
        %1590 = vmatpush1.bf16.xpose.msra.mxu0 0
        %1591 = vmatprep.subr.bf16.mxu0 0
        %1592 = vmatpush1.bf16.xpose.msra.mxu0 0
        %1593 = vmatprep.subr.bf16.mxu0 0
        %1594 = vmatpush1.bf16.xpose.msra.mxu0 0
        %1595 = vmatprep.mubr.bf16.mxu0 0
        %1596 = vmatmul.mubr.bf16.gmra.mrb[0].mxu0 %v1558
        %v1597 = vpop.f32.mrb[0].mxu0
        %v1598 = vadd.f32 0.0, %v1597
        %v1599 = vpop.f32.mrb[0].mxu0
        %v1600 = vpop.f32.mrb[0].mxu0
        %v1601 = vpop.f32.mrb[0].mxu0
        %1602 = vdwg.mxu0
        %1604 = vrot.lane.b32.xlu0 %v1298, 64
        %v1605 = vpop.permute.xlu0 %1604
        %v1607 = vsel %vm1311, %v1298, 0
        %v1610 = vsel %vm1311, %v1605, 0
        %1612 = vmatprep.subr.bf16.mxu0 0
        %1613 = vmatpush1.bf16.xpose.msra.mxu0 %v1610
        %1614 = vmatprep.subr.bf16.mxu0 0
        %1615 = vmatpush1.bf16.xpose.msra.mxu0 0
        %1616 = vmatprep.subr.bf16.mxu0 0
        %1617 = vmatpush1.bf16.xpose.msra.mxu0 0
        %1618 = vmatprep.subr.bf16.mxu0 0
        %1619 = vmatpush1.bf16.xpose.msra.mxu0 0
        %1620 = vmatprep.subr.bf16.mxu0 0
        %1621 = vmatpush1.bf16.xpose.msra.mxu0 0
        %1622 = vmatprep.subr.bf16.mxu0 0
        %1623 = vmatpush1.bf16.xpose.msra.mxu0 0
        %1624 = vmatprep.subr.bf16.mxu0 0
        %1625 = vmatpush1.bf16.xpose.msra.mxu0 0
        %1626 = vmatprep.subr.bf16.mxu0 0
        %1627 = vmatpush1.bf16.xpose.msra.mxu0 0
        %1628 = vmatprep.subr.bf16.mxu0 0
        %1629 = vmatpush1.bf16.xpose.msra.mxu0 0
        %1630 = vmatprep.subr.bf16.mxu0 0
        %1631 = vmatpush1.bf16.xpose.msra.mxu0 0
        %1632 = vmatprep.subr.bf16.mxu0 0
        %1633 = vmatpush1.bf16.xpose.msra.mxu0 0
        %1634 = vmatprep.subr.bf16.mxu0 0
        %1635 = vmatpush1.bf16.xpose.msra.mxu0 0
        %1636 = vmatprep.subr.bf16.mxu0 0
        %1637 = vmatpush1.bf16.xpose.msra.mxu0 0
        %1638 = vmatprep.subr.bf16.mxu0 0
        %1639 = vmatpush1.bf16.xpose.msra.mxu0 0
        %1640 = vmatprep.subr.bf16.mxu0 0
        %1641 = vmatpush1.bf16.xpose.msra.mxu0 0
        %1642 = vmatprep.subr.bf16.mxu0 0
        %1643 = vmatpush1.bf16.xpose.msra.mxu0 0
        %1644 = vmatprep.mubr.bf16.mxu0 0
        %1645 = vmatmul.mubr.bf16.gmra.mrb[0].mxu0 %v1607
        %v1646 = vpop.f32.mrb[0].mxu0
        %v1647 = vadd.f32 0.0, %v1646
        %v1648 = vpop.f32.mrb[0].mxu0
        %v1649 = vpop.f32.mrb[0].mxu0
        %v1650 = vpop.f32.mrb[0].mxu0
        %1651 = vdwg.mxu0
        %1653 = vrot.lane.b32.xlu0 %v1299, 64
        %v1654 = vpop.permute.xlu0 %1653
        %v1656 = vsel %vm1311, %v1299, 0
        %v1659 = vsel %vm1311, %v1654, 0
        %1661 = vmatprep.subr.bf16.mxu0 0
        %1662 = vmatpush1.bf16.xpose.msra.mxu0 %v1659
        %1663 = vmatprep.subr.bf16.mxu0 0
        %1664 = vmatpush1.bf16.xpose.msra.mxu0 0
        %1665 = vmatprep.subr.bf16.mxu0 0
        %1666 = vmatpush1.bf16.xpose.msra.mxu0 0
        %1667 = vmatprep.subr.bf16.mxu0 0
        %1668 = vmatpush1.bf16.xpose.msra.mxu0 0
        %1669 = vmatprep.subr.bf16.mxu0 0
        %1670 = vmatpush1.bf16.xpose.msra.mxu0 0
        %1671 = vmatprep.subr.bf16.mxu0 0
        %1672 = vmatpush1.bf16.xpose.msra.mxu0 0
        %1673 = vmatprep.subr.bf16.mxu0 0
        %1674 = vmatpush1.bf16.xpose.msra.mxu0 0
        %1675 = vmatprep.subr.bf16.mxu0 0
        %1676 = vmatpush1.bf16.xpose.msra.mxu0 0
        %1677 = vmatprep.subr.bf16.mxu0 0
        %1678 = vmatpush1.bf16.xpose.msra.mxu0 0
        %1679 = vmatprep.subr.bf16.mxu0 0
        %1680 = vmatpush1.bf16.xpose.msra.mxu0 0
        %1681 = vmatprep.subr.bf16.mxu0 0
        %1682 = vmatpush1.bf16.xpose.msra.mxu0 0
        %1683 = vmatprep.subr.bf16.mxu0 0
        %1684 = vmatpush1.bf16.xpose.msra.mxu0 0
        %1685 = vmatprep.subr.bf16.mxu0 0
        %1686 = vmatpush1.bf16.xpose.msra.mxu0 0
        %1687 = vmatprep.subr.bf16.mxu0 0
        %1688 = vmatpush1.bf16.xpose.msra.mxu0 0
        %1689 = vmatprep.subr.bf16.mxu0 0
        %1690 = vmatpush1.bf16.xpose.msra.mxu0 0
        %1691 = vmatprep.subr.bf16.mxu0 0
        %1692 = vmatpush1.bf16.xpose.msra.mxu0 0
        %1693 = vmatprep.mubr.bf16.mxu0 0
        %1694 = vmatmul.mubr.bf16.gmra.mrb[0].mxu0 %v1656
        %v1695 = vpop.f32.mrb[0].mxu0
        %v1696 = vadd.f32 0.0, %v1695
        %v1697 = vpop.f32.mrb[0].mxu0
        %v1698 = vpop.f32.mrb[0].mxu0
        %v1699 = vpop.f32.mrb[0].mxu0
        %1700 = vdwg.mxu0
        %v1701 = vmul.f32 %v1353, 0.125
        %v1702 = vmul.f32 %v1402, 0.125
        %v1703 = vmul.f32 %v1451, 0.125
        %v1704 = vmul.f32 %v1500, 0.125
        %v1705 = vmul.f32 %v1549, 0.125
        %v1706 = vmul.f32 %v1598, 0.125
        %v1707 = vmul.f32 %v1647, 0.125
        %v1708 = vmul.f32 %v1696, 0.125
        %vm1709 = vcmask 64512
        %v1710 = vsel %vm1709, %v1701, -inf
        %1711 = vmax.xlane.f32.xlu0 %v1710
        %v1712 = vpop.xlane.xlu0 %1711
        %v1713 = vsel %vm1709, %v1702, -inf
        %1714 = vmax.xlane.f32.xlu0 %v1713
        %v1715 = vpop.xlane.xlu0 %1714
        %v1716 = vsel %vm1709, %v1703, -inf
        %1717 = vmax.xlane.f32.xlu0 %v1716
        %v1718 = vpop.xlane.xlu0 %1717
        %v1719 = vsel %vm1709, %v1704, -inf
        %1720 = vmax.xlane.f32.xlu0 %v1719
        %v1721 = vpop.xlane.xlu0 %1720
        %v1722 = vsel %vm1709, %v1705, -inf
        %1723 = vmax.xlane.f32.xlu0 %v1722
        %v1724 = vpop.xlane.xlu0 %1723
        %v1725 = vsel %vm1709, %v1706, -inf
        %1726 = vmax.xlane.f32.xlu0 %v1725
        %v1727 = vpop.xlane.xlu0 %1726
        %v1728 = vsel %vm1709, %v1707, -inf
        %1729 = vmax.xlane.f32.xlu0 %v1728
        %v1730 = vpop.xlane.xlu0 %1729
        %v1731 = vsel %vm1709, %v1708, -inf
        %1732 = vmax.xlane.f32.xlu0 %v1731
        %v1733 = vpop.xlane.xlu0 %1732
        %v1734 = vsub.f32 %v1701, %v1712
        %v1735 = vsub.f32 %v1702, %v1715
        %v1736 = vsub.f32 %v1703, %v1718
        %v1737 = vsub.f32 %v1704, %v1721
        %v1738 = vsub.f32 %v1705, %v1724
        %v1739 = vsub.f32 %v1706, %v1727
        %v1740 = vsub.f32 %v1707, %v1730
        %v1741 = vsub.f32 %v1708, %v1733
        %v1742 = vmul.f32 %v1734, 1.442695
        %v1743 = vpow.pop %v1742
        %v1744 = vmul.f32 %v1735, 1.442695
        %v1745 = vpow.pop %v1744
        %v1746 = vmul.f32 %v1736, 1.442695
        %v1747 = vpow.pop %v1746
        %v1748 = vmul.f32 %v1737, 1.442695
        %v1749 = vpow.pop %v1748
        %v1750 = vmul.f32 %v1738, 1.442695
        %v1751 = vpow.pop %v1750
        %v1752 = vmul.f32 %v1739, 1.442695
        %v1753 = vpow.pop %v1752
        %v1754 = vmul.f32 %v1740, 1.442695
        %v1755 = vpow.pop %v1754
        %v1756 = vmul.f32 %v1741, 1.442695
        %v1757 = vpow.pop %v1756
        %v1758 = vsel %vm1709, %v1743, 0.0
        %1759 = vadd.xlane.f32.xlu0 %v1758
        %v1760 = vpop.xlane.xlu0 %1759
        %v1761 = vsel %vm1709, %v1745, 0.0
        %1762 = vadd.xlane.f32.xlu0 %v1761
        %v1763 = vpop.xlane.xlu0 %1762
        %v1764 = vsel %vm1709, %v1747, 0.0
        %1765 = vadd.xlane.f32.xlu0 %v1764
        %v1766 = vpop.xlane.xlu0 %1765
        %v1767 = vsel %vm1709, %v1749, 0.0
        %1768 = vadd.xlane.f32.xlu0 %v1767
        %v1769 = vpop.xlane.xlu0 %1768
        %v1770 = vsel %vm1709, %v1751, 0.0
        %1771 = vadd.xlane.f32.xlu0 %v1770
        %v1772 = vpop.xlane.xlu0 %1771
        %v1773 = vsel %vm1709, %v1753, 0.0
        %1774 = vadd.xlane.f32.xlu0 %v1773
        %v1775 = vpop.xlane.xlu0 %1774
        %v1776 = vsel %vm1709, %v1755, 0.0
        %1777 = vadd.xlane.f32.xlu0 %v1776
        %v1778 = vpop.xlane.xlu0 %1777
        %v1779 = vsel %vm1709, %v1757, 0.0
        %1780 = vadd.xlane.f32.xlu0 %v1779
        %v1781 = vpop.xlane.xlu0 %1780
        %v1782 = vrcp.pop %v1760
        %v1783 = vrcp.pop %v1763
        %v1784 = vrcp.pop %v1766
        %v1785 = vrcp.pop %v1769
        %v1786 = vrcp.pop %v1772
        %v1787 = vrcp.pop %v1775
        %v1788 = vrcp.pop %v1778
        %v1789 = vrcp.pop %v1781
        %v1790 = vmul.f32 %v1743, %v1782
        %v1791 = vmul.f32 %v1745, %v1783
        %v1792 = vmul.f32 %v1747, %v1784
        %v1793 = vmul.f32 %v1749, %v1785
        %v1794 = vmul.f32 %v1751, %v1786
        %v1795 = vmul.f32 %v1753, %v1787
        %v1796 = vmul.f32 %v1755, %v1788
        %v1797 = vmul.f32 %v1757, %v1789
        %v1798 = vpack.c.bf16 %v1790, %v1790
        %v1799 = vpack.c.bf16 %v1791, %v1791
        %v1800 = vpack.c.bf16 %v1792, %v1792
        %v1801 = vpack.c.bf16 %v1793, %v1793
        %v1802 = vpack.c.bf16 %v1794, %v1794
        %v1803 = vpack.c.bf16 %v1795, %v1795
        %v1804 = vpack.c.bf16 %v1796, %v1796
        %v1805 = vpack.c.bf16 %v1797, %v1797
        %v1807 = vsel %vm1709, %v1798, 0
        %vm1809 = vcmask 1043456
        %v1811 = vsel %vm1809, %v1300, 0
        %1813 = vmatprep.subr.bf16.mxu0 0
        %1814 = vmatpush1.bf16.msra.mxu0 %v1811
        %1815 = vmatprep.subr.bf16.mxu0 0
        %1816 = vmatpush1.bf16.msra.mxu0 0
        %1817 = vmatprep.subr.bf16.mxu0 0
        %1818 = vmatpush1.bf16.msra.mxu0 0
        %1819 = vmatprep.subr.bf16.mxu0 0
        %1820 = vmatpush1.bf16.msra.mxu0 0
        %1821 = vmatprep.subr.bf16.mxu0 0
        %1822 = vmatpush1.bf16.msra.mxu0 0
        %1823 = vmatprep.subr.bf16.mxu0 0
        %1824 = vmatpush1.bf16.msra.mxu0 0
        %1825 = vmatprep.subr.bf16.mxu0 0
        %1826 = vmatpush1.bf16.msra.mxu0 0
        %1827 = vmatprep.subr.bf16.mxu0 0
        %1828 = vmatpush1.bf16.msra.mxu0 0
        %1829 = vmatprep.subr.bf16.mxu0 0
        %1830 = vmatpush1.bf16.msra.mxu0 0
        %1831 = vmatprep.subr.bf16.mxu0 0
        %1832 = vmatpush1.bf16.msra.mxu0 0
        %1833 = vmatprep.subr.bf16.mxu0 0
        %1834 = vmatpush1.bf16.msra.mxu0 0
        %1835 = vmatprep.subr.bf16.mxu0 0
        %1836 = vmatpush1.bf16.msra.mxu0 0
        %1837 = vmatprep.subr.bf16.mxu0 0
        %1838 = vmatpush1.bf16.msra.mxu0 0
        %1839 = vmatprep.subr.bf16.mxu0 0
        %1840 = vmatpush1.bf16.msra.mxu0 0
        %1841 = vmatprep.subr.bf16.mxu0 0
        %1842 = vmatpush1.bf16.msra.mxu0 0
        %1843 = vmatprep.subr.bf16.mxu0 0
        %1844 = vmatpush1.bf16.msra.mxu0 0
        %1845 = vmatprep.mubr.bf16.mxu0 0
        %1846 = vmatmul.mubr.bf16.gmra.mrb[0].mxu0 %v1807
        %v1847 = vpop.f32.mrb[0].mxu0
        %v1848 = vadd.f32 0.0, %v1847
        %v1849 = vpop.f32.mrb[0].mxu0
        %v1850 = vpop.f32.mrb[0].mxu0
        %v1851 = vpop.f32.mrb[0].mxu0
        %1852 = vdwg.mxu0
        %v1854 = vsel %vm1709, %v1799, 0
        %v1857 = vsel %vm1809, %v1301, 0
        %1859 = vmatprep.subr.bf16.mxu0 0
        %1860 = vmatpush1.bf16.msra.mxu0 %v1857
        %1861 = vmatprep.subr.bf16.mxu0 0
        %1862 = vmatpush1.bf16.msra.mxu0 0
        %1863 = vmatprep.subr.bf16.mxu0 0
        %1864 = vmatpush1.bf16.msra.mxu0 0
        %1865 = vmatprep.subr.bf16.mxu0 0
        %1866 = vmatpush1.bf16.msra.mxu0 0
        %1867 = vmatprep.subr.bf16.mxu0 0
        %1868 = vmatpush1.bf16.msra.mxu0 0
        %1869 = vmatprep.subr.bf16.mxu0 0
        %1870 = vmatpush1.bf16.msra.mxu0 0
        %1871 = vmatprep.subr.bf16.mxu0 0
        %1872 = vmatpush1.bf16.msra.mxu0 0
        %1873 = vmatprep.subr.bf16.mxu0 0
        %1874 = vmatpush1.bf16.msra.mxu0 0
        %1875 = vmatprep.subr.bf16.mxu0 0
        %1876 = vmatpush1.bf16.msra.mxu0 0
        %1877 = vmatprep.subr.bf16.mxu0 0
        %1878 = vmatpush1.bf16.msra.mxu0 0
        %1879 = vmatprep.subr.bf16.mxu0 0
        %1880 = vmatpush1.bf16.msra.mxu0 0
        %1881 = vmatprep.subr.bf16.mxu0 0
        %1882 = vmatpush1.bf16.msra.mxu0 0
        %1883 = vmatprep.subr.bf16.mxu0 0
        %1884 = vmatpush1.bf16.msra.mxu0 0
        %1885 = vmatprep.subr.bf16.mxu0 0
        %1886 = vmatpush1.bf16.msra.mxu0 0
        %1887 = vmatprep.subr.bf16.mxu0 0
        %1888 = vmatpush1.bf16.msra.mxu0 0
        %1889 = vmatprep.subr.bf16.mxu0 0
        %1890 = vmatpush1.bf16.msra.mxu0 0
        %1891 = vmatprep.mubr.bf16.mxu0 0
        %1892 = vmatmul.mubr.bf16.gmra.mrb[0].mxu0 %v1854
        %v1893 = vpop.f32.mrb[0].mxu0
        %v1894 = vadd.f32 0.0, %v1893
        %v1895 = vpop.f32.mrb[0].mxu0
        %v1896 = vpop.f32.mrb[0].mxu0
        %v1897 = vpop.f32.mrb[0].mxu0
        %1898 = vdwg.mxu0
        %v1900 = vsel %vm1709, %v1800, 0
        %v1903 = vsel %vm1809, %v1302, 0
        %1905 = vmatprep.subr.bf16.mxu0 0
        %1906 = vmatpush1.bf16.msra.mxu0 %v1903
        %1907 = vmatprep.subr.bf16.mxu0 0
        %1908 = vmatpush1.bf16.msra.mxu0 0
        %1909 = vmatprep.subr.bf16.mxu0 0
        %1910 = vmatpush1.bf16.msra.mxu0 0
        %1911 = vmatprep.subr.bf16.mxu0 0
        %1912 = vmatpush1.bf16.msra.mxu0 0
        %1913 = vmatprep.subr.bf16.mxu0 0
        %1914 = vmatpush1.bf16.msra.mxu0 0
        %1915 = vmatprep.subr.bf16.mxu0 0
        %1916 = vmatpush1.bf16.msra.mxu0 0
        %1917 = vmatprep.subr.bf16.mxu0 0
        %1918 = vmatpush1.bf16.msra.mxu0 0
        %1919 = vmatprep.subr.bf16.mxu0 0
        %1920 = vmatpush1.bf16.msra.mxu0 0
        %1921 = vmatprep.subr.bf16.mxu0 0
        %1922 = vmatpush1.bf16.msra.mxu0 0
        %1923 = vmatprep.subr.bf16.mxu0 0
        %1924 = vmatpush1.bf16.msra.mxu0 0
        %1925 = vmatprep.subr.bf16.mxu0 0
        %1926 = vmatpush1.bf16.msra.mxu0 0
        %1927 = vmatprep.subr.bf16.mxu0 0
        %1928 = vmatpush1.bf16.msra.mxu0 0
        %1929 = vmatprep.subr.bf16.mxu0 0
        %1930 = vmatpush1.bf16.msra.mxu0 0
        %1931 = vmatprep.subr.bf16.mxu0 0
        %1932 = vmatpush1.bf16.msra.mxu0 0
        %1933 = vmatprep.subr.bf16.mxu0 0
        %1934 = vmatpush1.bf16.msra.mxu0 0
        %1935 = vmatprep.subr.bf16.mxu0 0
        %1936 = vmatpush1.bf16.msra.mxu0 0
        %1937 = vmatprep.mubr.bf16.mxu0 0
        %1938 = vmatmul.mubr.bf16.gmra.mrb[0].mxu0 %v1900
        %v1939 = vpop.f32.mrb[0].mxu0
        %v1940 = vadd.f32 0.0, %v1939
        %v1941 = vpop.f32.mrb[0].mxu0
        %v1942 = vpop.f32.mrb[0].mxu0
        %v1943 = vpop.f32.mrb[0].mxu0
        %1944 = vdwg.mxu0
        %v1946 = vsel %vm1709, %v1801, 0
        %v1949 = vsel %vm1809, %v1303, 0
        %1951 = vmatprep.subr.bf16.mxu0 0
        %1952 = vmatpush1.bf16.msra.mxu0 %v1949
        %1953 = vmatprep.subr.bf16.mxu0 0
        %1954 = vmatpush1.bf16.msra.mxu0 0
        %1955 = vmatprep.subr.bf16.mxu0 0
        %1956 = vmatpush1.bf16.msra.mxu0 0
        %1957 = vmatprep.subr.bf16.mxu0 0
        %1958 = vmatpush1.bf16.msra.mxu0 0
        %1959 = vmatprep.subr.bf16.mxu0 0
        %1960 = vmatpush1.bf16.msra.mxu0 0
        %1961 = vmatprep.subr.bf16.mxu0 0
        %1962 = vmatpush1.bf16.msra.mxu0 0
        %1963 = vmatprep.subr.bf16.mxu0 0
        %1964 = vmatpush1.bf16.msra.mxu0 0
        %1965 = vmatprep.subr.bf16.mxu0 0
        %1966 = vmatpush1.bf16.msra.mxu0 0
        %1967 = vmatprep.subr.bf16.mxu0 0
        %1968 = vmatpush1.bf16.msra.mxu0 0
        %1969 = vmatprep.subr.bf16.mxu0 0
        %1970 = vmatpush1.bf16.msra.mxu0 0
        %1971 = vmatprep.subr.bf16.mxu0 0
        %1972 = vmatpush1.bf16.msra.mxu0 0
        %1973 = vmatprep.subr.bf16.mxu0 0
        %1974 = vmatpush1.bf16.msra.mxu0 0
        %1975 = vmatprep.subr.bf16.mxu0 0
        %1976 = vmatpush1.bf16.msra.mxu0 0
        %1977 = vmatprep.subr.bf16.mxu0 0
        %1978 = vmatpush1.bf16.msra.mxu0 0
        %1979 = vmatprep.subr.bf16.mxu0 0
        %1980 = vmatpush1.bf16.msra.mxu0 0
        %1981 = vmatprep.subr.bf16.mxu0 0
        %1982 = vmatpush1.bf16.msra.mxu0 0
        %1983 = vmatprep.mubr.bf16.mxu0 0
        %1984 = vmatmul.mubr.bf16.gmra.mrb[0].mxu0 %v1946
        %v1985 = vpop.f32.mrb[0].mxu0
        %v1986 = vadd.f32 0.0, %v1985
        %v1987 = vpop.f32.mrb[0].mxu0
        %v1988 = vpop.f32.mrb[0].mxu0
        %v1989 = vpop.f32.mrb[0].mxu0
        %1990 = vdwg.mxu0
        %v1992 = vsel %vm1709, %v1802, 0
        %v1995 = vsel %vm1809, %v1304, 0
        %1997 = vmatprep.subr.bf16.mxu0 0
        %1998 = vmatpush1.bf16.msra.mxu0 %v1995
        %1999 = vmatprep.subr.bf16.mxu0 0
        %2000 = vmatpush1.bf16.msra.mxu0 0
        %2001 = vmatprep.subr.bf16.mxu0 0
        %2002 = vmatpush1.bf16.msra.mxu0 0
        %2003 = vmatprep.subr.bf16.mxu0 0
        %2004 = vmatpush1.bf16.msra.mxu0 0
        %2005 = vmatprep.subr.bf16.mxu0 0
        %2006 = vmatpush1.bf16.msra.mxu0 0
        %2007 = vmatprep.subr.bf16.mxu0 0
        %2008 = vmatpush1.bf16.msra.mxu0 0
        %2009 = vmatprep.subr.bf16.mxu0 0
        %2010 = vmatpush1.bf16.msra.mxu0 0
        %2011 = vmatprep.subr.bf16.mxu0 0
        %2012 = vmatpush1.bf16.msra.mxu0 0
        %2013 = vmatprep.subr.bf16.mxu0 0
        %2014 = vmatpush1.bf16.msra.mxu0 0
        %2015 = vmatprep.subr.bf16.mxu0 0
        %2016 = vmatpush1.bf16.msra.mxu0 0
        %2017 = vmatprep.subr.bf16.mxu0 0
        %2018 = vmatpush1.bf16.msra.mxu0 0
        %2019 = vmatprep.subr.bf16.mxu0 0
        %2020 = vmatpush1.bf16.msra.mxu0 0
        %2021 = vmatprep.subr.bf16.mxu0 0
        %2022 = vmatpush1.bf16.msra.mxu0 0
        %2023 = vmatprep.subr.bf16.mxu0 0
        %2024 = vmatpush1.bf16.msra.mxu0 0
        %2025 = vmatprep.subr.bf16.mxu0 0
        %2026 = vmatpush1.bf16.msra.mxu0 0
        %2027 = vmatprep.subr.bf16.mxu0 0
        %2028 = vmatpush1.bf16.msra.mxu0 0
        %2029 = vmatprep.mubr.bf16.mxu0 0
        %2030 = vmatmul.mubr.bf16.gmra.mrb[0].mxu0 %v1992
        %v2031 = vpop.f32.mrb[0].mxu0
        %v2032 = vadd.f32 0.0, %v2031
        %v2033 = vpop.f32.mrb[0].mxu0
        %v2034 = vpop.f32.mrb[0].mxu0
        %v2035 = vpop.f32.mrb[0].mxu0
        %2036 = vdwg.mxu0
        %v2038 = vsel %vm1709, %v1803, 0
        %v2041 = vsel %vm1809, %v1305, 0
        %2043 = vmatprep.subr.bf16.mxu0 0
        %2044 = vmatpush1.bf16.msra.mxu0 %v2041
        %2045 = vmatprep.subr.bf16.mxu0 0
        %2046 = vmatpush1.bf16.msra.mxu0 0
        %2047 = vmatprep.subr.bf16.mxu0 0
        %2048 = vmatpush1.bf16.msra.mxu0 0
        %2049 = vmatprep.subr.bf16.mxu0 0
        %2050 = vmatpush1.bf16.msra.mxu0 0
        %2051 = vmatprep.subr.bf16.mxu0 0
        %2052 = vmatpush1.bf16.msra.mxu0 0
        %2053 = vmatprep.subr.bf16.mxu0 0
        %2054 = vmatpush1.bf16.msra.mxu0 0
        %2055 = vmatprep.subr.bf16.mxu0 0
        %2056 = vmatpush1.bf16.msra.mxu0 0
        %2057 = vmatprep.subr.bf16.mxu0 0
        %2058 = vmatpush1.bf16.msra.mxu0 0
        %2059 = vmatprep.subr.bf16.mxu0 0
        %2060 = vmatpush1.bf16.msra.mxu0 0
        %2061 = vmatprep.subr.bf16.mxu0 0
        %2062 = vmatpush1.bf16.msra.mxu0 0
        %2063 = vmatprep.subr.bf16.mxu0 0
        %2064 = vmatpush1.bf16.msra.mxu0 0
        %2065 = vmatprep.subr.bf16.mxu0 0
        %2066 = vmatpush1.bf16.msra.mxu0 0
        %2067 = vmatprep.subr.bf16.mxu0 0
        %2068 = vmatpush1.bf16.msra.mxu0 0
        %2069 = vmatprep.subr.bf16.mxu0 0
        %2070 = vmatpush1.bf16.msra.mxu0 0
        %2071 = vmatprep.subr.bf16.mxu0 0
        %2072 = vmatpush1.bf16.msra.mxu0 0
        %2073 = vmatprep.subr.bf16.mxu0 0
        %2074 = vmatpush1.bf16.msra.mxu0 0
        %2075 = vmatprep.mubr.bf16.mxu0 0
        %2076 = vmatmul.mubr.bf16.gmra.mrb[0].mxu0 %v2038
        %v2077 = vpop.f32.mrb[0].mxu0
        %v2078 = vadd.f32 0.0, %v2077
        %v2079 = vpop.f32.mrb[0].mxu0
        %v2080 = vpop.f32.mrb[0].mxu0
        %v2081 = vpop.f32.mrb[0].mxu0
        %2082 = vdwg.mxu0
        %v2084 = vsel %vm1709, %v1804, 0
        %v2087 = vsel %vm1809, %v1306, 0
        %2089 = vmatprep.subr.bf16.mxu0 0
        %2090 = vmatpush1.bf16.msra.mxu0 %v2087
        %2091 = vmatprep.subr.bf16.mxu0 0
        %2092 = vmatpush1.bf16.msra.mxu0 0
        %2093 = vmatprep.subr.bf16.mxu0 0
        %2094 = vmatpush1.bf16.msra.mxu0 0
        %2095 = vmatprep.subr.bf16.mxu0 0
        %2096 = vmatpush1.bf16.msra.mxu0 0
        %2097 = vmatprep.subr.bf16.mxu0 0
        %2098 = vmatpush1.bf16.msra.mxu0 0
        %2099 = vmatprep.subr.bf16.mxu0 0
        %2100 = vmatpush1.bf16.msra.mxu0 0
        %2101 = vmatprep.subr.bf16.mxu0 0
        %2102 = vmatpush1.bf16.msra.mxu0 0
        %2103 = vmatprep.subr.bf16.mxu0 0
        %2104 = vmatpush1.bf16.msra.mxu0 0
        %2105 = vmatprep.subr.bf16.mxu0 0
        %2106 = vmatpush1.bf16.msra.mxu0 0
        %2107 = vmatprep.subr.bf16.mxu0 0
        %2108 = vmatpush1.bf16.msra.mxu0 0
        %2109 = vmatprep.subr.bf16.mxu0 0
        %2110 = vmatpush1.bf16.msra.mxu0 0
        %2111 = vmatprep.subr.bf16.mxu0 0
        %2112 = vmatpush1.bf16.msra.mxu0 0
        %2113 = vmatprep.subr.bf16.mxu0 0
        %2114 = vmatpush1.bf16.msra.mxu0 0
        %2115 = vmatprep.subr.bf16.mxu0 0
        %2116 = vmatpush1.bf16.msra.mxu0 0
        %2117 = vmatprep.subr.bf16.mxu0 0
        %2118 = vmatpush1.bf16.msra.mxu0 0
        %2119 = vmatprep.subr.bf16.mxu0 0
        %2120 = vmatpush1.bf16.msra.mxu0 0
        %2121 = vmatprep.mubr.bf16.mxu0 0
        %2122 = vmatmul.mubr.bf16.gmra.mrb[0].mxu0 %v2084
        %v2123 = vpop.f32.mrb[0].mxu0
        %v2124 = vadd.f32 0.0, %v2123
        %v2125 = vpop.f32.mrb[0].mxu0
        %v2126 = vpop.f32.mrb[0].mxu0
        %v2127 = vpop.f32.mrb[0].mxu0
        %2128 = vdwg.mxu0
        %v2130 = vsel %vm1709, %v1805, 0
        %v2133 = vsel %vm1809, %v1307, 0
        %2135 = vmatprep.subr.bf16.mxu0 0
        %2136 = vmatpush1.bf16.msra.mxu0 %v2133
        %2137 = vmatprep.subr.bf16.mxu0 0
        %2138 = vmatpush1.bf16.msra.mxu0 0
        %2139 = vmatprep.subr.bf16.mxu0 0
        %2140 = vmatpush1.bf16.msra.mxu0 0
        %2141 = vmatprep.subr.bf16.mxu0 0
        %2142 = vmatpush1.bf16.msra.mxu0 0
        %2143 = vmatprep.subr.bf16.mxu0 0
        %2144 = vmatpush1.bf16.msra.mxu0 0
        %2145 = vmatprep.subr.bf16.mxu0 0
        %2146 = vmatpush1.bf16.msra.mxu0 0
        %2147 = vmatprep.subr.bf16.mxu0 0
        %2148 = vmatpush1.bf16.msra.mxu0 0
        %2149 = vmatprep.subr.bf16.mxu0 0
        %2150 = vmatpush1.bf16.msra.mxu0 0
        %2151 = vmatprep.subr.bf16.mxu0 0
        %2152 = vmatpush1.bf16.msra.mxu0 0
        %2153 = vmatprep.subr.bf16.mxu0 0
        %2154 = vmatpush1.bf16.msra.mxu0 0
        %2155 = vmatprep.subr.bf16.mxu0 0
        %2156 = vmatpush1.bf16.msra.mxu0 0
        %2157 = vmatprep.subr.bf16.mxu0 0
        %2158 = vmatpush1.bf16.msra.mxu0 0
        %2159 = vmatprep.subr.bf16.mxu0 0
        %2160 = vmatpush1.bf16.msra.mxu0 0
        %2161 = vmatprep.subr.bf16.mxu0 0
        %2162 = vmatpush1.bf16.msra.mxu0 0
        %2163 = vmatprep.subr.bf16.mxu0 0
        %2164 = vmatpush1.bf16.msra.mxu0 0
        %2165 = vmatprep.subr.bf16.mxu0 0
        %2166 = vmatpush1.bf16.msra.mxu0 0
        %2167 = vmatprep.mubr.bf16.mxu0 0
        %2168 = vmatmul.mubr.bf16.gmra.mrb[0].mxu0 %v2130
        %v2169 = vpop.f32.mrb[0].mxu0
        %v2170 = vadd.f32 0.0, %v2169
        %v2171 = vpop.f32.mrb[0].mxu0
        %v2172 = vpop.f32.mrb[0].mxu0
        %v2173 = vpop.f32.mrb[0].mxu0
        %2174 = vdwg.mxu0
        %v2175 = vpack.c.bf16 %v1848, %v1848
        %v2176 = vpack.c.bf16 %v1894, %v1894
        %v2177 = vpack.c.bf16 %v1940, %v1940
        %v2178 = vpack.c.bf16 %v1986, %v1986
        %v2179 = vpack.c.bf16 %v2032, %v2032
        %v2180 = vpack.c.bf16 %v2078, %v2078
        %v2181 = vpack.c.bf16 %v2124, %v2124
        %v2182 = vpack.c.bf16 %v2170, %v2170
        %v2183 = vld [vmem:[%s2] sm:$0xf]
        %v2184 = vld [vmem:[%s2 + $0x4] sm:$0xf]
        %v2185 = vld [vmem:[%s2 + $0x8] sm:$0xf]
        %v2186 = vld [vmem:[%s2 + $0xc] sm:$0xf]
        %v2187 = vld [vmem:[%s2 + $0x10] sm:$0xf]
        %v2188 = vld [vmem:[%s2 + $0x14] sm:$0xf]
        %v2189 = vld [vmem:[%s2 + $0x18] sm:$0xf]
        %v2190 = vld [vmem:[%s2 + $0x1c] sm:$0xf]
        %v2191 = vld [vmem:[%s2 + $0x20] sm:$0xf]
        %v2192 = vld [vmem:[%s2 + $0x24] sm:$0xf]
        %v2193 = vld [vmem:[%s2 + $0x28] sm:$0xf]
        %v2194 = vld [vmem:[%s2 + $0x2c] sm:$0xf]
        %v2195 = vld [vmem:[%s2 + $0x30] sm:$0xf]
        %v2196 = vld [vmem:[%s2 + $0x34] sm:$0xf]
        %v2197 = vld [vmem:[%s2 + $0x38] sm:$0xf]
        %v2198 = vld [vmem:[%s2 + $0x3c] sm:$0xf]
        %v2199 = vld [vmem:[%s2 + $0x40] sm:$0xf]
        %v2200 = vld [vmem:[%s2 + $0x44] sm:$0xf]
        %v2201 = vld [vmem:[%s2 + $0x48] sm:$0xf]
        %v2202 = vld [vmem:[%s2 + $0x4c] sm:$0xf]
        %v2203 = vld [vmem:[%s2 + $0x50] sm:$0xf]
        %v2204 = vld [vmem:[%s2 + $0x54] sm:$0xf]
        %v2205 = vld [vmem:[%s2 + $0x58] sm:$0xf]
        %v2206 = vld [vmem:[%s2 + $0x5c] sm:$0xf]
        %v2207 = vld [vmem:[%s2 + $0x60] sm:$0xf]
        %v2208 = vld [vmem:[%s2 + $0x64] sm:$0xf]
        %v2209 = vld [vmem:[%s2 + $0x68] sm:$0xf]
        %v2210 = vld [vmem:[%s2 + $0x6c] sm:$0xf]
        %v2211 = vld [vmem:[%s2 + $0x70] sm:$0xf]
        %v2212 = vld [vmem:[%s2 + $0x74] sm:$0xf]
        %v2213 = vld [vmem:[%s2 + $0x78] sm:$0xf]
        %v2214 = vld [vmem:[%s2 + $0x7c] sm:$0xf]
        %v2215 = vld [vmem:[%s2 + $0x80] sm:$0xf]
        %v2216 = vld [vmem:[%s2 + $0x84] sm:$0xf]
        %v2217 = vld [vmem:[%s2 + $0x88] sm:$0xf]
        %v2218 = vld [vmem:[%s2 + $0x8c] sm:$0xf]
        %v2219 = vld [vmem:[%s2 + $0x90] sm:$0xf]
        %v2220 = vld [vmem:[%s2 + $0x94] sm:$0xf]
        %v2221 = vld [vmem:[%s2 + $0x98] sm:$0xf]
        %v2222 = vld [vmem:[%s2 + $0x9c] sm:$0xf]
        %v2223 = vld [vmem:[%s2 + $0xa0] sm:$0xf]
        %v2224 = vld [vmem:[%s2 + $0xa4] sm:$0xf]
        %v2225 = vld [vmem:[%s2 + $0xa8] sm:$0xf]
        %v2226 = vld [vmem:[%s2 + $0xac] sm:$0xf]
        %v2227 = vld [vmem:[%s2 + $0xb0] sm:$0xf]
        %v2228 = vld [vmem:[%s2 + $0xb4] sm:$0xf]
        %v2229 = vld [vmem:[%s2 + $0xb8] sm:$0xf]
        %v2230 = vld [vmem:[%s2 + $0xbc] sm:$0xf]
        %v2231 = vld [vmem:[%s2 + $0xc0] sm:$0xf]
        %v2232 = vld [vmem:[%s2 + $0xc4] sm:$0xf]
        %v2233 = vld [vmem:[%s2 + $0xc8] sm:$0xf]
        %v2234 = vld [vmem:[%s2 + $0xcc] sm:$0xf]
        %v2235 = vld [vmem:[%s2 + $0xd0] sm:$0xf]
        %v2236 = vld [vmem:[%s2 + $0xd4] sm:$0xf]
        %v2237 = vld [vmem:[%s2 + $0xd8] sm:$0xf]
        %v2238 = vld [vmem:[%s2 + $0xdc] sm:$0xf]
        %v2239 = vld [vmem:[%s2 + $0xe0] sm:$0xf]
        %v2240 = vld [vmem:[%s2 + $0xe4] sm:$0xf]
        %v2241 = vld [vmem:[%s2 + $0xe8] sm:$0xf]
        %v2242 = vld [vmem:[%s2 + $0xec] sm:$0xf]
        %v2243 = vld [vmem:[%s2 + $0xf0] sm:$0xf]
        %v2244 = vld [vmem:[%s2 + $0xf4] sm:$0xf]
        %v2245 = vld [vmem:[%s2 + $0xf8] sm:$0xf]
        %v2246 = vld [vmem:[%s2 + $0xfc] sm:$0xf]
        %v2255 = vunpack.c.l.b16 %v2183
        %v2256 = vunpack.c.l.b16 %v2184
        %v2257 = vunpack.c.l.b16 %v2185
        %v2258 = vunpack.c.l.b16 %v2186
        %v2259 = vunpack.c.l.b16 %v2187
        %v2260 = vunpack.c.l.b16 %v2188
        %v2261 = vunpack.c.l.b16 %v2189
        %v2262 = vunpack.c.l.b16 %v2190
        %v2263 = vpack.c.b16 %v2256, %v2255
        %v2264 = vpack.c.b16 %v2258, %v2257
        %v2265 = vpack.c.b16 %v2260, %v2259
        %v2266 = vpack.c.b16 %v2262, %v2261
        %v2272 = vsel %vm1311, %v2175, 0
        %2274 = vmatprep.subr.bf16.mxu0 0
        %2275 = vmatpush1.bf16.msra.mxu0 %v2263
        %2276 = vmatprep.subr.bf16.mxu0 0
        %2277 = vmatpush1.bf16.msra.mxu0 %v2264
        %2278 = vmatprep.subr.bf16.mxu0 0
        %2279 = vmatpush1.bf16.msra.mxu0 %v2265
        %2280 = vmatprep.subr.bf16.mxu0 0
        %2281 = vmatpush1.bf16.msra.mxu0 %v2266
        %2282 = vmatprep.subr.bf16.mxu0 0
        %2283 = vmatpush1.bf16.msra.mxu0 0
        %2284 = vmatprep.subr.bf16.mxu0 0
        %2285 = vmatpush1.bf16.msra.mxu0 0
        %2286 = vmatprep.subr.bf16.mxu0 0
        %2287 = vmatpush1.bf16.msra.mxu0 0
        %2288 = vmatprep.subr.bf16.mxu0 0
        %2289 = vmatpush1.bf16.msra.mxu0 0
        %2290 = vmatprep.subr.bf16.mxu0 0
        %2291 = vmatpush1.bf16.msra.mxu0 0
        %2292 = vmatprep.subr.bf16.mxu0 0
        %2293 = vmatpush1.bf16.msra.mxu0 0
        %2294 = vmatprep.subr.bf16.mxu0 0
        %2295 = vmatpush1.bf16.msra.mxu0 0
        %2296 = vmatprep.subr.bf16.mxu0 0
        %2297 = vmatpush1.bf16.msra.mxu0 0
        %2298 = vmatprep.subr.bf16.mxu0 0
        %2299 = vmatpush1.bf16.msra.mxu0 0
        %2300 = vmatprep.subr.bf16.mxu0 0
        %2301 = vmatpush1.bf16.msra.mxu0 0
        %2302 = vmatprep.subr.bf16.mxu0 0
        %2303 = vmatpush1.bf16.msra.mxu0 0
        %2304 = vmatprep.subr.bf16.mxu0 0
        %2305 = vmatpush1.bf16.msra.mxu0 0
        %2306 = vmatprep.mubr.bf16.mxu0 0
        %2307 = vmatmul.mubr.bf16.gmra.mrb[0].mxu0 %v2272
        %v2308 = vpop.f32.mrb[0].mxu0
        %v2309 = vadd.f32 0.0, %v2308
        %v2310 = vpop.f32.mrb[0].mxu0
        %v2311 = vpop.f32.mrb[0].mxu0
        %v2312 = vpop.f32.mrb[0].mxu0
        %2313 = vdwg.mxu0
        %v2322 = vunpack.c.l.b16 %v2191
        %v2323 = vunpack.c.l.b16 %v2192
        %v2324 = vunpack.c.l.b16 %v2193
        %v2325 = vunpack.c.l.b16 %v2194
        %v2326 = vunpack.c.l.b16 %v2195
        %v2327 = vunpack.c.l.b16 %v2196
        %v2328 = vunpack.c.l.b16 %v2197
        %v2329 = vunpack.c.l.b16 %v2198
        %v2330 = vpack.c.b16 %v2323, %v2322
        %v2331 = vpack.c.b16 %v2325, %v2324
        %v2332 = vpack.c.b16 %v2327, %v2326
        %v2333 = vpack.c.b16 %v2329, %v2328
        %v2339 = vsel %vm1311, %v2176, 0
        %2341 = vmatprep.subr.bf16.mxu0 0
        %2342 = vmatpush1.bf16.msra.mxu0 %v2330
        %2343 = vmatprep.subr.bf16.mxu0 0
        %2344 = vmatpush1.bf16.msra.mxu0 %v2331
        %2345 = vmatprep.subr.bf16.mxu0 0
        %2346 = vmatpush1.bf16.msra.mxu0 %v2332
        %2347 = vmatprep.subr.bf16.mxu0 0
        %2348 = vmatpush1.bf16.msra.mxu0 %v2333
        %2349 = vmatprep.subr.bf16.mxu0 0
        %2350 = vmatpush1.bf16.msra.mxu0 0
        %2351 = vmatprep.subr.bf16.mxu0 0
        %2352 = vmatpush1.bf16.msra.mxu0 0
        %2353 = vmatprep.subr.bf16.mxu0 0
        %2354 = vmatpush1.bf16.msra.mxu0 0
        %2355 = vmatprep.subr.bf16.mxu0 0
        %2356 = vmatpush1.bf16.msra.mxu0 0
        %2357 = vmatprep.subr.bf16.mxu0 0
        %2358 = vmatpush1.bf16.msra.mxu0 0
        %2359 = vmatprep.subr.bf16.mxu0 0
        %2360 = vmatpush1.bf16.msra.mxu0 0
        %2361 = vmatprep.subr.bf16.mxu0 0
        %2362 = vmatpush1.bf16.msra.mxu0 0
        %2363 = vmatprep.subr.bf16.mxu0 0
        %2364 = vmatpush1.bf16.msra.mxu0 0
        %2365 = vmatprep.subr.bf16.mxu0 0
        %2366 = vmatpush1.bf16.msra.mxu0 0
        %2367 = vmatprep.subr.bf16.mxu0 0
        %2368 = vmatpush1.bf16.msra.mxu0 0
        %2369 = vmatprep.subr.bf16.mxu0 0
        %2370 = vmatpush1.bf16.msra.mxu0 0
        %2371 = vmatprep.subr.bf16.mxu0 0
        %2372 = vmatpush1.bf16.msra.mxu0 0
        %2373 = vmatprep.mubr.bf16.mxu0 0
        %2374 = vmatmul.mubr.bf16.gmra.mrb[0].mxu0 %v2339
        %v2375 = vpop.f32.mrb[0].mxu0
        %v2376 = vadd.f32 0.0, %v2375
        %v2377 = vpop.f32.mrb[0].mxu0
        %v2378 = vpop.f32.mrb[0].mxu0
        %v2379 = vpop.f32.mrb[0].mxu0
        %2380 = vdwg.mxu0
        %v2389 = vunpack.c.l.b16 %v2199
        %v2390 = vunpack.c.l.b16 %v2200
        %v2391 = vunpack.c.l.b16 %v2201
        %v2392 = vunpack.c.l.b16 %v2202
        %v2393 = vunpack.c.l.b16 %v2203
        %v2394 = vunpack.c.l.b16 %v2204
        %v2395 = vunpack.c.l.b16 %v2205
        %v2396 = vunpack.c.l.b16 %v2206
        %v2397 = vpack.c.b16 %v2390, %v2389
        %v2398 = vpack.c.b16 %v2392, %v2391
        %v2399 = vpack.c.b16 %v2394, %v2393
        %v2400 = vpack.c.b16 %v2396, %v2395
        %v2406 = vsel %vm1311, %v2177, 0
        %2408 = vmatprep.subr.bf16.mxu0 0
        %2409 = vmatpush1.bf16.msra.mxu0 %v2397
        %2410 = vmatprep.subr.bf16.mxu0 0
        %2411 = vmatpush1.bf16.msra.mxu0 %v2398
        %2412 = vmatprep.subr.bf16.mxu0 0
        %2413 = vmatpush1.bf16.msra.mxu0 %v2399
        %2414 = vmatprep.subr.bf16.mxu0 0
        %2415 = vmatpush1.bf16.msra.mxu0 %v2400
        %2416 = vmatprep.subr.bf16.mxu0 0
        %2417 = vmatpush1.bf16.msra.mxu0 0
        %2418 = vmatprep.subr.bf16.mxu0 0
        %2419 = vmatpush1.bf16.msra.mxu0 0
        %2420 = vmatprep.subr.bf16.mxu0 0
        %2421 = vmatpush1.bf16.msra.mxu0 0
        %2422 = vmatprep.subr.bf16.mxu0 0
        %2423 = vmatpush1.bf16.msra.mxu0 0
        %2424 = vmatprep.subr.bf16.mxu0 0
        %2425 = vmatpush1.bf16.msra.mxu0 0
        %2426 = vmatprep.subr.bf16.mxu0 0
        %2427 = vmatpush1.bf16.msra.mxu0 0
        %2428 = vmatprep.subr.bf16.mxu0 0
        %2429 = vmatpush1.bf16.msra.mxu0 0
        %2430 = vmatprep.subr.bf16.mxu0 0
        %2431 = vmatpush1.bf16.msra.mxu0 0
        %2432 = vmatprep.subr.bf16.mxu0 0
        %2433 = vmatpush1.bf16.msra.mxu0 0
        %2434 = vmatprep.subr.bf16.mxu0 0
        %2435 = vmatpush1.bf16.msra.mxu0 0
        %2436 = vmatprep.subr.bf16.mxu0 0
        %2437 = vmatpush1.bf16.msra.mxu0 0
        %2438 = vmatprep.subr.bf16.mxu0 0
        %2439 = vmatpush1.bf16.msra.mxu0 0
        %2440 = vmatprep.mubr.bf16.mxu0 0
        %2441 = vmatmul.mubr.bf16.gmra.mrb[0].mxu0 %v2406
        %v2442 = vpop.f32.mrb[0].mxu0
        %v2443 = vadd.f32 0.0, %v2442
        %v2444 = vpop.f32.mrb[0].mxu0
        %v2445 = vpop.f32.mrb[0].mxu0
        %v2446 = vpop.f32.mrb[0].mxu0
        %2447 = vdwg.mxu0
        %v2456 = vunpack.c.l.b16 %v2207
        %v2457 = vunpack.c.l.b16 %v2208
        %v2458 = vunpack.c.l.b16 %v2209
        %v2459 = vunpack.c.l.b16 %v2210
        %v2460 = vunpack.c.l.b16 %v2211
        %v2461 = vunpack.c.l.b16 %v2212
        %v2462 = vunpack.c.l.b16 %v2213
        %v2463 = vunpack.c.l.b16 %v2214
        %v2464 = vpack.c.b16 %v2457, %v2456
        %v2465 = vpack.c.b16 %v2459, %v2458
        %v2466 = vpack.c.b16 %v2461, %v2460
        %v2467 = vpack.c.b16 %v2463, %v2462
        %v2473 = vsel %vm1311, %v2178, 0
        %2475 = vmatprep.subr.bf16.mxu0 0
        %2476 = vmatpush1.bf16.msra.mxu0 %v2464
        %2477 = vmatprep.subr.bf16.mxu0 0
        %2478 = vmatpush1.bf16.msra.mxu0 %v2465
        %2479 = vmatprep.subr.bf16.mxu0 0
        %2480 = vmatpush1.bf16.msra.mxu0 %v2466
        %2481 = vmatprep.subr.bf16.mxu0 0
        %2482 = vmatpush1.bf16.msra.mxu0 %v2467
        %2483 = vmatprep.subr.bf16.mxu0 0
        %2484 = vmatpush1.bf16.msra.mxu0 0
        %2485 = vmatprep.subr.bf16.mxu0 0
        %2486 = vmatpush1.bf16.msra.mxu0 0
        %2487 = vmatprep.subr.bf16.mxu0 0
        %2488 = vmatpush1.bf16.msra.mxu0 0
        %2489 = vmatprep.subr.bf16.mxu0 0
        %2490 = vmatpush1.bf16.msra.mxu0 0
        %2491 = vmatprep.subr.bf16.mxu0 0
        %2492 = vmatpush1.bf16.msra.mxu0 0
        %2493 = vmatprep.subr.bf16.mxu0 0
        %2494 = vmatpush1.bf16.msra.mxu0 0
        %2495 = vmatprep.subr.bf16.mxu0 0
        %2496 = vmatpush1.bf16.msra.mxu0 0
        %2497 = vmatprep.subr.bf16.mxu0 0
        %2498 = vmatpush1.bf16.msra.mxu0 0
        %2499 = vmatprep.subr.bf16.mxu0 0
        %2500 = vmatpush1.bf16.msra.mxu0 0
        %2501 = vmatprep.subr.bf16.mxu0 0
        %2502 = vmatpush1.bf16.msra.mxu0 0
        %2503 = vmatprep.subr.bf16.mxu0 0
        %2504 = vmatpush1.bf16.msra.mxu0 0
        %2505 = vmatprep.subr.bf16.mxu0 0
        %2506 = vmatpush1.bf16.msra.mxu0 0
        %2507 = vmatprep.mubr.bf16.mxu0 0
        %2508 = vmatmul.mubr.bf16.gmra.mrb[0].mxu0 %v2473
        %v2509 = vpop.f32.mrb[0].mxu0
        %v2510 = vadd.f32 0.0, %v2509
        %v2511 = vpop.f32.mrb[0].mxu0
        %v2512 = vpop.f32.mrb[0].mxu0
        %v2513 = vpop.f32.mrb[0].mxu0
        %2514 = vdwg.mxu0
        %v2523 = vunpack.c.l.b16 %v2215
        %v2524 = vunpack.c.l.b16 %v2216
        %v2525 = vunpack.c.l.b16 %v2217
        %v2526 = vunpack.c.l.b16 %v2218
        %v2527 = vunpack.c.l.b16 %v2219
        %v2528 = vunpack.c.l.b16 %v2220
        %v2529 = vunpack.c.l.b16 %v2221
        %v2530 = vunpack.c.l.b16 %v2222
        %v2531 = vpack.c.b16 %v2524, %v2523
        %v2532 = vpack.c.b16 %v2526, %v2525
        %v2533 = vpack.c.b16 %v2528, %v2527
        %v2534 = vpack.c.b16 %v2530, %v2529
        %v2540 = vsel %vm1311, %v2179, 0
        %2542 = vmatprep.subr.bf16.mxu0 0
        %2543 = vmatpush1.bf16.msra.mxu0 %v2531
        %2544 = vmatprep.subr.bf16.mxu0 0
        %2545 = vmatpush1.bf16.msra.mxu0 %v2532
        %2546 = vmatprep.subr.bf16.mxu0 0
        %2547 = vmatpush1.bf16.msra.mxu0 %v2533
        %2548 = vmatprep.subr.bf16.mxu0 0
        %2549 = vmatpush1.bf16.msra.mxu0 %v2534
        %2550 = vmatprep.subr.bf16.mxu0 0
        %2551 = vmatpush1.bf16.msra.mxu0 0
        %2552 = vmatprep.subr.bf16.mxu0 0
        %2553 = vmatpush1.bf16.msra.mxu0 0
        %2554 = vmatprep.subr.bf16.mxu0 0
        %2555 = vmatpush1.bf16.msra.mxu0 0
        %2556 = vmatprep.subr.bf16.mxu0 0
        %2557 = vmatpush1.bf16.msra.mxu0 0
        %2558 = vmatprep.subr.bf16.mxu0 0
        %2559 = vmatpush1.bf16.msra.mxu0 0
        %2560 = vmatprep.subr.bf16.mxu0 0
        %2561 = vmatpush1.bf16.msra.mxu0 0
        %2562 = vmatprep.subr.bf16.mxu0 0
        %2563 = vmatpush1.bf16.msra.mxu0 0
        %2564 = vmatprep.subr.bf16.mxu0 0
        %2565 = vmatpush1.bf16.msra.mxu0 0
        %2566 = vmatprep.subr.bf16.mxu0 0
        %2567 = vmatpush1.bf16.msra.mxu0 0
        %2568 = vmatprep.subr.bf16.mxu0 0
        %2569 = vmatpush1.bf16.msra.mxu0 0
        %2570 = vmatprep.subr.bf16.mxu0 0
        %2571 = vmatpush1.bf16.msra.mxu0 0
        %2572 = vmatprep.subr.bf16.mxu0 0
        %2573 = vmatpush1.bf16.msra.mxu0 0
        %2574 = vmatprep.mubr.bf16.mxu0 0
        %2575 = vmatmul.mubr.bf16.gmra.mrb[0].mxu0 %v2540
        %v2576 = vpop.f32.mrb[0].mxu0
        %v2577 = vadd.f32 0.0, %v2576
        %v2578 = vpop.f32.mrb[0].mxu0
        %v2579 = vpop.f32.mrb[0].mxu0
        %v2580 = vpop.f32.mrb[0].mxu0
        %2581 = vdwg.mxu0
        %v2590 = vunpack.c.l.b16 %v2223
        %v2591 = vunpack.c.l.b16 %v2224
        %v2592 = vunpack.c.l.b16 %v2225
        %v2593 = vunpack.c.l.b16 %v2226
        %v2594 = vunpack.c.l.b16 %v2227
        %v2595 = vunpack.c.l.b16 %v2228
        %v2596 = vunpack.c.l.b16 %v2229
        %v2597 = vunpack.c.l.b16 %v2230
        %v2598 = vpack.c.b16 %v2591, %v2590
        %v2599 = vpack.c.b16 %v2593, %v2592
        %v2600 = vpack.c.b16 %v2595, %v2594
        %v2601 = vpack.c.b16 %v2597, %v2596
        %v2607 = vsel %vm1311, %v2180, 0
        %2609 = vmatprep.subr.bf16.mxu0 0
        %2610 = vmatpush1.bf16.msra.mxu0 %v2598
        %2611 = vmatprep.subr.bf16.mxu0 0
        %2612 = vmatpush1.bf16.msra.mxu0 %v2599
        %2613 = vmatprep.subr.bf16.mxu0 0
        %2614 = vmatpush1.bf16.msra.mxu0 %v2600
        %2615 = vmatprep.subr.bf16.mxu0 0
        %2616 = vmatpush1.bf16.msra.mxu0 %v2601
        %2617 = vmatprep.subr.bf16.mxu0 0
        %2618 = vmatpush1.bf16.msra.mxu0 0
        %2619 = vmatprep.subr.bf16.mxu0 0
        %2620 = vmatpush1.bf16.msra.mxu0 0
        %2621 = vmatprep.subr.bf16.mxu0 0
        %2622 = vmatpush1.bf16.msra.mxu0 0
        %2623 = vmatprep.subr.bf16.mxu0 0
        %2624 = vmatpush1.bf16.msra.mxu0 0
        %2625 = vmatprep.subr.bf16.mxu0 0
        %2626 = vmatpush1.bf16.msra.mxu0 0
        %2627 = vmatprep.subr.bf16.mxu0 0
        %2628 = vmatpush1.bf16.msra.mxu0 0
        %2629 = vmatprep.subr.bf16.mxu0 0
        %2630 = vmatpush1.bf16.msra.mxu0 0
        %2631 = vmatprep.subr.bf16.mxu0 0
        %2632 = vmatpush1.bf16.msra.mxu0 0
        %2633 = vmatprep.subr.bf16.mxu0 0
        %2634 = vmatpush1.bf16.msra.mxu0 0
        %2635 = vmatprep.subr.bf16.mxu0 0
        %2636 = vmatpush1.bf16.msra.mxu0 0
        %2637 = vmatprep.subr.bf16.mxu0 0
        %2638 = vmatpush1.bf16.msra.mxu0 0
        %2639 = vmatprep.subr.bf16.mxu0 0
        %2640 = vmatpush1.bf16.msra.mxu0 0
        %2641 = vmatprep.mubr.bf16.mxu0 0
        %2642 = vmatmul.mubr.bf16.gmra.mrb[0].mxu0 %v2607
        %v2643 = vpop.f32.mrb[0].mxu0
        %v2644 = vadd.f32 0.0, %v2643
        %v2645 = vpop.f32.mrb[0].mxu0
        %v2646 = vpop.f32.mrb[0].mxu0
        %v2647 = vpop.f32.mrb[0].mxu0
        %2648 = vdwg.mxu0
        %v2657 = vunpack.c.l.b16 %v2231
        %v2658 = vunpack.c.l.b16 %v2232
        %v2659 = vunpack.c.l.b16 %v2233
        %v2660 = vunpack.c.l.b16 %v2234
        %v2661 = vunpack.c.l.b16 %v2235
        %v2662 = vunpack.c.l.b16 %v2236
        %v2663 = vunpack.c.l.b16 %v2237
        %v2664 = vunpack.c.l.b16 %v2238
        %v2665 = vpack.c.b16 %v2658, %v2657
        %v2666 = vpack.c.b16 %v2660, %v2659
        %v2667 = vpack.c.b16 %v2662, %v2661
        %v2668 = vpack.c.b16 %v2664, %v2663
        %v2674 = vsel %vm1311, %v2181, 0
        %2676 = vmatprep.subr.bf16.mxu0 0
        %2677 = vmatpush1.bf16.msra.mxu0 %v2665
        %2678 = vmatprep.subr.bf16.mxu0 0
        %2679 = vmatpush1.bf16.msra.mxu0 %v2666
        %2680 = vmatprep.subr.bf16.mxu0 0
        %2681 = vmatpush1.bf16.msra.mxu0 %v2667
        %2682 = vmatprep.subr.bf16.mxu0 0
        %2683 = vmatpush1.bf16.msra.mxu0 %v2668
        %2684 = vmatprep.subr.bf16.mxu0 0
        %2685 = vmatpush1.bf16.msra.mxu0 0
        %2686 = vmatprep.subr.bf16.mxu0 0
        %2687 = vmatpush1.bf16.msra.mxu0 0
        %2688 = vmatprep.subr.bf16.mxu0 0
        %2689 = vmatpush1.bf16.msra.mxu0 0
        %2690 = vmatprep.subr.bf16.mxu0 0
        %2691 = vmatpush1.bf16.msra.mxu0 0
        %2692 = vmatprep.subr.bf16.mxu0 0
        %2693 = vmatpush1.bf16.msra.mxu0 0
        %2694 = vmatprep.subr.bf16.mxu0 0
        %2695 = vmatpush1.bf16.msra.mxu0 0
        %2696 = vmatprep.subr.bf16.mxu0 0
        %2697 = vmatpush1.bf16.msra.mxu0 0
        %2698 = vmatprep.subr.bf16.mxu0 0
        %2699 = vmatpush1.bf16.msra.mxu0 0
        %2700 = vmatprep.subr.bf16.mxu0 0
        %2701 = vmatpush1.bf16.msra.mxu0 0
        %2702 = vmatprep.subr.bf16.mxu0 0
        %2703 = vmatpush1.bf16.msra.mxu0 0
        %2704 = vmatprep.subr.bf16.mxu0 0
        %2705 = vmatpush1.bf16.msra.mxu0 0
        %2706 = vmatprep.subr.bf16.mxu0 0
        %2707 = vmatpush1.bf16.msra.mxu0 0
        %2708 = vmatprep.mubr.bf16.mxu0 0
        %2709 = vmatmul.mubr.bf16.gmra.mrb[0].mxu0 %v2674
        %v2710 = vpop.f32.mrb[0].mxu0
        %v2711 = vadd.f32 0.0, %v2710
        %v2712 = vpop.f32.mrb[0].mxu0
        %v2713 = vpop.f32.mrb[0].mxu0
        %v2714 = vpop.f32.mrb[0].mxu0
        %2715 = vdwg.mxu0
        %v2724 = vunpack.c.l.b16 %v2239
        %v2725 = vunpack.c.l.b16 %v2240
        %v2726 = vunpack.c.l.b16 %v2241
        %v2727 = vunpack.c.l.b16 %v2242
        %v2728 = vunpack.c.l.b16 %v2243
        %v2729 = vunpack.c.l.b16 %v2244
        %v2730 = vunpack.c.l.b16 %v2245
        %v2731 = vunpack.c.l.b16 %v2246
        %v2732 = vpack.c.b16 %v2725, %v2724
        %v2733 = vpack.c.b16 %v2727, %v2726
        %v2734 = vpack.c.b16 %v2729, %v2728
        %v2735 = vpack.c.b16 %v2731, %v2730
        %v2741 = vsel %vm1311, %v2182, 0
        %2743 = vmatprep.subr.bf16.mxu0 0
        %2744 = vmatpush1.bf16.msra.mxu0 %v2732
        %2745 = vmatprep.subr.bf16.mxu0 0
        %2746 = vmatpush1.bf16.msra.mxu0 %v2733
        %2747 = vmatprep.subr.bf16.mxu0 0
        %2748 = vmatpush1.bf16.msra.mxu0 %v2734
        %2749 = vmatprep.subr.bf16.mxu0 0
        %2750 = vmatpush1.bf16.msra.mxu0 %v2735
        %2751 = vmatprep.subr.bf16.mxu0 0
        %2752 = vmatpush1.bf16.msra.mxu0 0
        %2753 = vmatprep.subr.bf16.mxu0 0
        %2754 = vmatpush1.bf16.msra.mxu0 0
        %2755 = vmatprep.subr.bf16.mxu0 0
        %2756 = vmatpush1.bf16.msra.mxu0 0
        %2757 = vmatprep.subr.bf16.mxu0 0
        %2758 = vmatpush1.bf16.msra.mxu0 0
        %2759 = vmatprep.subr.bf16.mxu0 0
        %2760 = vmatpush1.bf16.msra.mxu0 0
        %2761 = vmatprep.subr.bf16.mxu0 0
        %2762 = vmatpush1.bf16.msra.mxu0 0
        %2763 = vmatprep.subr.bf16.mxu0 0
        %2764 = vmatpush1.bf16.msra.mxu0 0
        %2765 = vmatprep.subr.bf16.mxu0 0
        %2766 = vmatpush1.bf16.msra.mxu0 0
        %2767 = vmatprep.subr.bf16.mxu0 0
        %2768 = vmatpush1.bf16.msra.mxu0 0
        %2769 = vmatprep.subr.bf16.mxu0 0
        %2770 = vmatpush1.bf16.msra.mxu0 0
        %2771 = vmatprep.subr.bf16.mxu0 0
        %2772 = vmatpush1.bf16.msra.mxu0 0
        %2773 = vmatprep.subr.bf16.mxu0 0
        %2774 = vmatpush1.bf16.msra.mxu0 0
        %2775 = vmatprep.mubr.bf16.mxu0 0
        %2776 = vmatmul.mubr.bf16.gmra.mrb[0].mxu0 %v2741
        %v2777 = vpop.f32.mrb[0].mxu0
        %v2778 = vadd.f32 0.0, %v2777
        %v2779 = vpop.f32.mrb[0].mxu0
        %v2780 = vpop.f32.mrb[0].mxu0
        %v2781 = vpop.f32.mrb[0].mxu0
        %2782 = vdwg.mxu0
        %v2783 = vadd.f32 %v2309, %v2376
        %v2784 = vadd.f32 %v2783, %v2443
        %v2785 = vadd.f32 %v2784, %v2510
        %v2786 = vadd.f32 %v2785, %v2577
        %v2787 = vadd.f32 %v2786, %v2644
        %v2788 = vadd.f32 %v2787, %v2711
        %v2789 = vadd.f32 %v2788, %v2778
        %v2790 = vld [vmem:[%s3] sm:$0x1]
        %v2792 = vlaneseq
        %v2793 = vshrl.u32 %v2792, 7
        %v2794 = vsub.s32 0, %v2793
        %v2795 = vrot.slane %v2790, %v2794
        %v2797 = vadd.f32 %v2789, %v2795
        %2798 = vst [vmem:[%s188] sm:$0xff] %v2797
        %s2799 = sand.u32 %s115, 1
        %s2800 = scalar_lea.sflag [#allocation3], %s2799
        %s2801 = sand.u32 %s115, 1
        %s2802 = smul.addr %s2801, 8
        %s2803 = scalar_lea.vmem [#allocation2], %s2802
        // Predicated region
        $region37: #{attention_forward.1} parent=35 // pred_check
          %p2804 = pneg %p125
        $region38: #{attention_forward.1} parent=35 // pred_check_branch
          %2806 = sbr.rel (%p2804) target = $region40
        $region39: #{attention_forward.1} parent=35 // pred_region
          %s2808 = ssub.s32 128, 128
          %2809 = vsyncadd %s2800, %s2808
          %s2810 = smul.addr %s18, 128
          %s2811 = scalar_lea.hbm %s4, %s2810
          %s2813 = sshll.u32 %s2803, 4
          %s2814 = int_to_ptr.vmem [resolvable:$true] %s2813
          %2816 = dma.vmem_to_hbm [thread:$0]  %s2814, 128, %s2811, %s2800
        $region40: #{attention_forward.1} parent=35 // pred_fallthru
          _
      $region36: #{attention_forward.1} parent=5 // pred_fallthru
        _
      %p2817 = scmp.le.s32.totalorder 2, %s13
      // Predicated region
      $region41: #{attention_forward.1} parent=5 // pred_check
        %p2818 = pneg %p2817
      $region42: #{attention_forward.1} parent=5 // pred_check_branch
        %2820 = sbr.rel (%p2818) target = $region44
      $region43: #{attention_forward.1} parent=5 // pred_region
        %s2821 = ssub.s32 %s13, 2
        // Predicated region
        $region45: #{attention_forward.1} parent=43 // pred_check
          %p2822 = pneg %p131
        $region46: #{attention_forward.1} parent=43 // pred_check_branch
          %2824 = sbr.rel (%p2822) target = $region48
        $region47: #{attention_forward.1} parent=43 // pred_region
          %s2825 = sand.u32 %s116, 1
          %s2826 = scalar_lea.sflag [#allocation3], %s2825
          %s2827 = sand.u32 %s116, 1
          %s2828 = smul.addr %s2827, 8
          %s2829 = scalar_lea.vmem [#allocation2], %s2828
          %2830 = dma.done %s2826, 128
        $region48: #{attention_forward.1} parent=43 // pred_fallthru
          _
      $region44: #{attention_forward.1} parent=5 // pred_fallthru
        _
    $region6: #{attention_forward.1} parent=1 // loop_footer
      %s17 = sadd.s32 1, %s13
    $region7: #{attention_forward.1} parent=1 // loop_footer_branch
      %12 = sbr.rel target = $region3
    $region8: #{attention_forward.1} parent=1 // loop_exit
      _
    %2831 = vsyncpa [#allocation3], 1
    %s2832 = scalar_lea.sflag [#allocation3], 1
    %2833 = vsyncpa %s2832, 1

</llo_original>
